<compile_context>
chip_gen: v7x
topology: tpu7x:2x2x1
jax: 0.10.0
libtpu: 0.0.40
codegen_flags: <defaults>
</compile_context>

<pallas_src>
import math
from functools import partial

import numpy as np
import jax
import jax.numpy as jnp
from jax.experimental import pallas as pl
from jax.experimental.pallas import tpu as pltpu


def _make_fused_kernel(Nb, C1, C2, H, W, K, layer_dims, halo, neg_slope):
    """Fused nearest-upsample + concat + [conv(K,'same') + LeakyReLU] * L.

    Ref order:
      x1_ref : (Nb, C1, h*w)            f32   low-res feature, per image
      x2_ref : (C2, Nb*H*W)             f32   cropped skip feature, channel-major
      u_ref  : (h*w, H*W)               bf16  0/1 nearest-upsample selection
      m_ref  : (K*K, 1, Nb*H*W)         f32   'same'-padding border masks per tap
      w_ref_l: (Cout_l, K*K*Cin_l + 8)  bf16  packed weights, bias in col K*K*Cin_l
      o_ref  : (Cout_last, Nb*H*W)
      xx_ref : (Cmax_in, halo+Nb*H*W+halo) f32  scratch (haloed activation)
      xk_ref : (max_rows, Nb*H*W)          bf16 scratch (patch matrix + ones rows)
    """
    HW = H * W
    NHW = Nb * HW
    KK = K * K
    pad = K // 2
    taps = [(kh - pad, kw - pad) for kh in range(K) for kw in range(K)]
    n_layers = len(layer_dims)
    cmax_in = max(cin for cin, _ in layer_dims)
    xx_shape = (cmax_in, 2 * halo + NHW)

    def kernel(x1_ref, x2_ref, u_ref, m_ref, *rest):
        w_refs = rest[:n_layers]
        o_ref = rest[n_layers]
        xx_ref, xk_ref = rest[n_layers + 1:]

        # Zero the haloed activation buffer: the halo edges (read by border
        # taps, then multiplied by the 0-mask) must be 0, not stale VMEM.
        xx_ref[...] = jnp.zeros(xx_shape, jnp.float32)

        # ---- layer-0 input: [x2_cropped ; nearest_upsample(x1)] ------------
        xx_ref[0:C2, halo:halo + NHW] = x2_ref[...]
        u = u_ref[...]
        for n in range(Nb):
            # nearest upsample as a 0/1 selection matmul (MXU, bf16 operands)
            x1u = jnp.dot(x1_ref[n].astype(jnp.bfloat16), u,
                          preferred_element_type=jnp.float32)       # (C1, HW)
            xx_ref[C2:C2 + C1, halo + n * HW:halo + (n + 1) * HW] = x1u

        # ---- [Conv KxK 'same' + LeakyReLU] * L, all resident in VMEM -------
        x = None
        for l, (cin, cout) in enumerate(layer_dims):
            if l > 0:
                xx_ref[0:cin, halo:halo + NHW] = x   # previous activation
            rows = KK * cin
            # assemble the patch matrix: one (cin, NHW) block per tap, taken
            # as a static offset load from the haloed buffer, border-masked,
            # cast to bf16 at the scratch store (bounds live ranges).
            for t, (dh, dw) in enumerate(taps):
                s = dh * W + dw
                tap = xx_ref[0:cin, halo + s:halo + s + NHW]        # (cin, NHW)
                if s != 0:
                    tap = tap * m_ref[t]            # zero the padding borders
                xk_ref[t * cin:(t + 1) * cin, :] = tap.astype(jnp.bfloat16)
            # 8 ones-rows fold the bias into the matmul (bias sits in column
            # `rows` of the packed weights; columns rows+1.. are zero).
            xk_ref[rows:rows + 8, :] = jnp.ones((8, NHW), jnp.bfloat16)

            # ONE wide MXU matmul per layer: (cout, rows+8) x (rows+8, NHW)
            acc = jnp.dot(w_refs[l][...], xk_ref[0:rows + 8, :],
                          preferred_element_type=jnp.float32)
            x = jnp.where(acc >= 0, acc, neg_slope * acc)           # LeakyReLU

        o_ref[...] = x.astype(o_ref.dtype)                          # lane-dense

    return kernel


def up_simple_forward(x1_nchw, x2_nchw, params, scale_factor=2, neg_slope=0.1,
                      images_per_step=None):
    """params: list of (w(K,K,Cin,Cout), b(Cout,)) per ConvBlock."""
    N, C1, h, w = x1_nchw.shape
    H, W = h * scale_factor, w * scale_factor
    hw, HW = h * w, H * W
    _, C2, H2, W2 = x2_nchw.shape
    K = params[0][0].shape[0]
    KK = K * K
    pad = K // 2
    # flat-lane taps may read across image/chunk boundaries; those reads land
    # only on border-masked positions as long as the halo fits inside one row.
    assert pad < W and pad < H

    # ---- center-crop x2 to (H, W)  (crop_to_match semantics) ---------------
    c = (H2 - H) / 2
    c1, c2 = math.ceil(c), math.floor(c)
    c = (W2 - W) / 2
    c3, c4 = math.ceil(c), math.floor(c)
    x2c = x2_nchw[:, :, c1:H2 - c2, c3:W2 - c4]

    # ---- batch-on-lanes layout ---------------------------------------------
    Nb = N if images_per_step is None else images_per_step
    assert N % Nb == 0
    NHW = Nb * HW
    # one HBM transpose each way: activations go channel-major, (C, N*H*W)
    x2_cm = jnp.transpose(x2c, (1, 0, 2, 3)).reshape(C2, N * HW)
    x1_b = x1_nchw.reshape(N, C1, hw)        # upsampled per-image in-kernel

    # ---- compile-time constants --------------------------------------------
    # nearest-upsample 0/1 selection matrix (hw, HW); exact in bf16.
    # TODO(synk): O(hw*HW) memory/flops -- switch to an O(HW) row/col expansion
    # (or spatial tiling) at large spatial sizes; first VMEM blow-up on v7x.
    qi = np.arange(HW)
    src = (qi // W // scale_factor) * w + (qi % W) // scale_factor
    U = np.zeros((hw, HW), np.float32)
    U[src, qi] = 1.0
    U = jnp.asarray(U, jnp.bfloat16)

    # 'same'-padding border masks per tap, tiled over the Nb images of a chunk
    ii, jj = qi // W, qi % W
    mlist = []
    for kh in range(K):
        for kw in range(K):
            dh, dw = kh - pad, kw - pad
            m = ((ii + dh >= 0) & (ii + dh < H) &
                 (jj + dw >= 0) & (jj + dw < W)).astype(np.float32)
            mlist.append(m.reshape(1, HW))
    masks = jnp.asarray(np.tile(np.stack(mlist, axis=0), (1, 1, Nb)))  # (KK,1,NHW)

    # packed weights: (Cout, KK*Cin + 8) bf16, tap-major / Cin-inner, bias
    # folded in as column KK*Cin (multiplied by the 8-row block of ones).
    wmats, layer_dims = [], []
    for wgt, b in params:
        Kh, Kw, Cin, Cout = wgt.shape
        wm = jnp.transpose(wgt, (3, 0, 1, 2)).reshape(Cout, Kh * Kw * Cin)
        extra = jnp.concatenate(
            [b.reshape(Cout, 1), jnp.zeros((Cout, 7), wm.dtype)], axis=1)
        wmats.append(jnp.concatenate([wm, extra], axis=1).astype(jnp.bfloat16))
        layer_dims.append((Cin, Cout))
    assert layer_dims[0][0] == C1 + C2
    for l in range(1, len(layer_dims)):
        assert layer_dims[l][0] == layer_dims[l - 1][1]
    Cout_last = layer_dims[-1][1]
    cmax_in = max(cin for cin, _ in layer_dims)
    max_rows = max(KK * cin + 8 for cin, _ in layer_dims)

    # halo sized to the largest flat tap offset, rounded up to a lane tile so
    # every in-kernel store stays 128-lane aligned (only loads are offset).
    halo = ((pad * (W + 1) + 127) // 128) * 128

    kernel = _make_fused_kernel(Nb, C1, C2, H, W, K, layer_dims, halo, neg_slope)

    in_specs = [
        pl.BlockSpec((Nb, C1, hw), lambda g: (g, 0, 0)),     # x1 (per-image)
        pl.BlockSpec((C2, NHW), lambda g: (0, g)),           # x2 (channel-major)
        pl.BlockSpec((hw, HW), lambda g: (0, 0)),            # selection matrix
        pl.BlockSpec((KK, 1, NHW), lambda g: (0, 0, 0)),     # border masks
    ]
    # TODO(synk): at larger shapes mark these grid-invariant operands
    # pipeline_mode=pl.Buffered(1) so they are not double-buffered (v7x VMEM).
    for wm in wmats:
        in_specs.append(pl.BlockSpec(wm.shape, lambda g: (0, 0)))

    out = pl.pallas_call(
        kernel,
        out_shape=jax.ShapeDtypeStruct((Cout_last, N * HW), x1_nchw.dtype),
        grid=(N // Nb,),
        in_specs=in_specs,
        out_specs=pl.BlockSpec((Cout_last, NHW), lambda g: (0, g)),
        scratch_shapes=[
            pltpu.VMEM((cmax_in, 2 * halo + NHW), jnp.float32),   # haloed act.
            pltpu.VMEM((max_rows, NHW), jnp.bfloat16),            # patch matrix
        ],
        compiler_params=pltpu.CompilerParams(
            dimension_semantics=("parallel",)),
    )(x1_b, x2_cm, U, masks, *wmats)

    # channel-major -> NCHW (one HBM transpose)
    return jnp.transpose(out.reshape(Cout_last, N, H, W), (1, 0, 2, 3))


def reference_forward(x1_nchw, x2_nchw, params, scale_factor=2):
    """Pure-JAX (XLA conv) reference for correctness checking."""
    x1u = jnp.repeat(jnp.repeat(x1_nchw, scale_factor, axis=2),
                     scale_factor, axis=3)
    H2, W2 = x2_nchw.shape[2], x2_nchw.shape[3]
    c = (H2 - x1u.shape[2]) / 2
    c1, c2 = math.ceil(c), math.floor(c)
    c = (W2 - x1u.shape[3]) / 2
    c3, c4 = math.ceil(c), math.floor(c)
    x2c = x2_nchw[:, :, c1:H2 - c2, c3:W2 - c4]
    x = jnp.concatenate([x2c, x1u], axis=1)
    for w, b in params:
        w_oihw = jnp.transpose(w, (3, 2, 0, 1))
        x = jax.lax.conv_general_dilated(
            x, w_oihw, window_strides=(1, 1), padding="SAME",
            dimension_numbers=("NCHW", "OIHW", "NCHW"))
        x = x + b.reshape(1, -1, 1, 1)
        x = jnp.where(x >= 0, x, 0.1 * x)
    return x


if __name__ == "__main__":
    key = jax.random.PRNGKey(0)
    kx1, kx2, kw1, kb1, kw2, kb2 = jax.random.split(key, 6)

    # Module config: n_filters=[8, 8, 4] -> two ConvBlocks (8->8, 8->4)
    n_filters = [8, 8, 4]
    scale = 2
    N = 2
    # x1: low-res feature (upsampled 2x -> 16x16); x2: skip feature (18 -> crop 16)
    x1 = jax.random.normal(kx1, (N, 4, 8, 8), jnp.float32)
    x2 = jax.random.normal(kx2, (N, 4, 18, 18), jnp.float32)

    # Deterministic parameter init (Kaiming-uniform-ish bounds like nn.Conv2d)
    params = []
    keys = [(kw1, kb1), (kw2, kb2)]
    for (cin, cout), (wk, bk) in zip(zip(n_filters[:-1], n_filters[1:]), keys):
        bound = 1.0 / math.sqrt(cin * 3 * 3)
        w = jax.random.uniform(wk, (3, 3, cin, cout), jnp.float32, -bound, bound)
        b = jax.random.uniform(bk, (cout,), jnp.float32, -bound, bound)
        params.append((w, b))

    fwd = jax.jit(partial(up_simple_forward, scale_factor=scale))
    out = fwd(x1, x2, params)
    out = jax.block_until_ready(out)

    ref = reference_forward(x1, x2, params, scale)
    assert out.shape == (N, n_filters[-1], 16, 16), out.shape
    # tolerance re-baselined for bf16 MXU operands (f32 accumulation kept)
    assert jnp.allclose(out, ref, atol=2e-2, rtol=2e-2), "mismatch vs reference"

    print("KERNEL_OK")
</pallas_src>

<mosaic_0001>
module attributes {stable_mosaic.version = 11 : i64} {
  func.func @kernel(%arg0: i32, %arg1: memref<2x4x64xf32, #tpu.memory_space<vmem>>, %arg2: memref<4x512xf32, #tpu.memory_space<vmem>>, %arg3: memref<64x256xbf16, #tpu.memory_space<vmem>>, %arg4: memref<9x1x512xf32, #tpu.memory_space<vmem>>, %arg5: memref<8x80xbf16, #tpu.memory_space<vmem>>, %arg6: memref<4x80xbf16, #tpu.memory_space<vmem>>, %arg7: memref<4x512xf32, #tpu.memory_space<vmem>>, %arg8: memref<8x768xf32, #tpu.memory_space<vmem>>, %arg9: memref<80x512xbf16, #tpu.memory_space<vmem>>) attributes {dimension_semantics = [#tpu.dimension_semantics<parallel>], iteration_bounds = array<i64: 1>, scalar_prefetch = 0 : i64, scratch_operands = 2 : i64, tpu.core_type = #tpu.core_type<tc>, window_params = [{transform_indices = @transform_0, window_bounds = array<i64: 2, 4, 64>}, {transform_indices = @transform_1, window_bounds = array<i64: 4, 512>}, {pipeline_mode = #tpu.pipeline_mode<synchronous>, transform_indices = @transform_2, window_bounds = array<i64: 64, 256>}, {pipeline_mode = #tpu.pipeline_mode<synchronous>, transform_indices = @transform_3, window_bounds = array<i64: 9, 1, 512>}, {pipeline_mode = #tpu.pipeline_mode<synchronous>, transform_indices = @transform_4, window_bounds = array<i64: 8, 80>}, {pipeline_mode = #tpu.pipeline_mode<synchronous>, transform_indices = @transform_5, window_bounds = array<i64: 4, 80>}, {transform_indices = @transform_6, window_bounds = array<i64: 4, 512>}]} {
    %cst = arith.constant 0.000000e+00 : f32
    %0 = vector.broadcast %cst : f32 to vector<8x768xf32>
    %c0 = arith.constant 0 : index
    %c0_0 = arith.constant 0 : index
    %1 = vector.load %arg8[%c0, %c0_0] : memref<8x768xf32, #tpu.memory_space<vmem>>, vector<8x768xf32>
    tpu.vector_store %arg8[%c0, %c0_0], %0 {strides = array<i32>} : memref<8x768xf32, #tpu.memory_space<vmem>>, vector<8x768xf32>,
    %c0_1 = arith.constant 0 : index
    %c0_2 = arith.constant 0 : index
    %2 = vector.load %arg2[%c0_1, %c0_2] : memref<4x512xf32, #tpu.memory_space<vmem>>, vector<4x512xf32>
    %c0_3 = arith.constant 0 : index
    %c128 = arith.constant 128 : index
    %3 = vector.load %arg8[%c0_3, %c128] : memref<8x768xf32, #tpu.memory_space<vmem>>, vector<4x512xf32>
    tpu.vector_store %arg8[%c0_3, %c128], %2 {strides = array<i32>} : memref<8x768xf32, #tpu.memory_space<vmem>>, vector<4x512xf32>,
    %c0_4 = arith.constant 0 : index
    %c0_5 = arith.constant 0 : index
    %4 = vector.load %arg3[%c0_4, %c0_5] : memref<64x256xbf16, #tpu.memory_space<vmem>>, vector<64x256xbf16>
    %c0_6 = arith.constant 0 : index
    %c0_7 = arith.constant 0 : index
    %c0_8 = arith.constant 0 : index
    %5 = vector.load %arg1[%c0_6, %c0_7, %c0_8] : memref<2x4x64xf32, #tpu.memory_space<vmem>>, vector<1x4x64xf32>
    %6 = vector.shape_cast %5 : vector<1x4x64xf32> to vector<4x64xf32>
    %7 = arith.truncf %6 : vector<4x64xf32> to vector<4x64xbf16>
    %cst_9 = arith.constant dense<0.000000e+00> : vector<4x256xf32>
    %8 = tpu.matmul %7, %4, %cst_9 {dimension_numbers = #tpu.dot_dimension_numbers<[1], [0], [0], [1], [0, 0, 1, 1], [], []>} : vector<4x64xbf16>, vector<64x256xbf16>, vector<4x256xf32> -> vector<4x256xf32>
    %c4 = arith.constant 4 : index
    %c128_10 = arith.constant 128 : index
    %9 = vector.load %arg8[%c4, %c128_10] : memref<8x768xf32, #tpu.memory_space<vmem>>, vector<4x256xf32>
    tpu.vector_store %arg8[%c4, %c128_10], %8 {strides = array<i32>} : memref<8x768xf32, #tpu.memory_space<vmem>>, vector<4x256xf32>,
    %c1 = arith.constant 1 : index
    %c0_11 = arith.constant 0 : index
    %c0_12 = arith.constant 0 : index
    %10 = vector.load %arg1[%c1, %c0_11, %c0_12] : memref<2x4x64xf32, #tpu.memory_space<vmem>>, vector<1x4x64xf32>
    %11 = vector.shape_cast %10 : vector<1x4x64xf32> to vector<4x64xf32>
    %12 = arith.truncf %11 : vector<4x64xf32> to vector<4x64xbf16>
    %cst_13 = arith.constant dense<0.000000e+00> : vector<4x256xf32>
    %13 = tpu.matmul %12, %4, %cst_13 {dimension_numbers = #tpu.dot_dimension_numbers<[1], [0], [0], [1], [0, 0, 1, 1], [], []>} : vector<4x64xbf16>, vector<64x256xbf16>, vector<4x256xf32> -> vector<4x256xf32>
    %c4_14 = arith.constant 4 : index
    %c384 = arith.constant 384 : index
    %14 = vector.load %arg8[%c4_14, %c384] : memref<8x768xf32, #tpu.memory_space<vmem>>, vector<4x256xf32>
    tpu.vector_store %arg8[%c4_14, %c384], %13 {strides = array<i32>} : memref<8x768xf32, #tpu.memory_space<vmem>>, vector<4x256xf32>,
    %c0_15 = arith.constant 0 : index
    %c111 = arith.constant 111 : index
    %15 = vector.load %arg8[%c0_15, %c111] : memref<8x768xf32, #tpu.memory_space<vmem>>, vector<8x512xf32>
    %c0_16 = arith.constant 0 : index
    %c0_17 = arith.constant 0 : index
    %c0_18 = arith.constant 0 : index
    %16 = vector.load %arg4[%c0_16, %c0_17, %c0_18] : memref<9x1x512xf32, #tpu.memory_space<vmem>>, vector<1x1x512xf32>
    %17 = vector.shape_cast %16 : vector<1x1x512xf32> to vector<1x512xf32>
    %18 = vector.broadcast %17 : vector<1x512xf32> to vector<8x512xf32>
    %19 = arith.mulf %15, %18 : vector<8x512xf32>
    %20 = arith.truncf %19 : vector<8x512xf32> to vector<8x512xbf16>
    %c0_19 = arith.constant 0 : index
    %c0_20 = arith.constant 0 : index
    %21 = vector.load %arg9[%c0_19, %c0_20] : memref<80x512xbf16, #tpu.memory_space<vmem>>, vector<8x512xbf16>
    tpu.vector_store %arg9[%c0_19, %c0_20], %20 {strides = array<i32>} : memref<80x512xbf16, #tpu.memory_space<vmem>>, vector<8x512xbf16>,
    %c0_21 = arith.constant 0 : index
    %c112 = arith.constant 112 : index
    %22 = vector.load %arg8[%c0_21, %c112] : memref<8x768xf32, #tpu.memory_space<vmem>>, vector<8x512xf32>
    %c1_22 = arith.constant 1 : index
    %c0_23 = arith.constant 0 : index
    %c0_24 = arith.constant 0 : index
    %23 = vector.load %arg4[%c1_22, %c0_23, %c0_24] : memref<9x1x512xf32, #tpu.memory_space<vmem>>, vector<1x1x512xf32>
    %24 = vector.shape_cast %23 : vector<1x1x512xf32> to vector<1x512xf32>
    %25 = vector.broadcast %24 : vector<1x512xf32> to vector<8x512xf32>
    %26 = arith.mulf %22, %25 : vector<8x512xf32>
    %27 = arith.truncf %26 : vector<8x512xf32> to vector<8x512xbf16>
    %c8 = arith.constant 8 : index
    %c0_25 = arith.constant 0 : index
    %28 = vector.load %arg9[%c8, %c0_25] : memref<80x512xbf16, #tpu.memory_space<vmem>>, vector<8x512xbf16>
    tpu.vector_store %arg9[%c8, %c0_25], %27 {strides = array<i32>} : memref<80x512xbf16, #tpu.memory_space<vmem>>, vector<8x512xbf16>,
    %c0_26 = arith.constant 0 : index
    %c113 = arith.constant 113 : index
    %29 = vector.load %arg8[%c0_26, %c113] : memref<8x768xf32, #tpu.memory_space<vmem>>, vector<8x512xf32>
    %c2 = arith.constant 2 : index
    %c0_27 = arith.constant 0 : index
    %c0_28 = arith.constant 0 : index
    %30 = vector.load %arg4[%c2, %c0_27, %c0_28] : memref<9x1x512xf32, #tpu.memory_space<vmem>>, vector<1x1x512xf32>
    %31 = vector.shape_cast %30 : vector<1x1x512xf32> to vector<1x512xf32>
    %32 = vector.broadcast %31 : vector<1x512xf32> to vector<8x512xf32>
    %33 = arith.mulf %29, %32 : vector<8x512xf32>
    %34 = arith.truncf %33 : vector<8x512xf32> to vector<8x512xbf16>
    %c16 = arith.constant 16 : index
    %c0_29 = arith.constant 0 : index
    %35 = vector.load %arg9[%c16, %c0_29] : memref<80x512xbf16, #tpu.memory_space<vmem>>, vector<8x512xbf16>
    tpu.vector_store %arg9[%c16, %c0_29], %34 {strides = array<i32>} : memref<80x512xbf16, #tpu.memory_space<vmem>>, vector<8x512xbf16>,
    %c0_30 = arith.constant 0 : index
    %c127 = arith.constant 127 : index
    %36 = vector.load %arg8[%c0_30, %c127] : memref<8x768xf32, #tpu.memory_space<vmem>>, vector<8x512xf32>
    %c3 = arith.constant 3 : index
    %c0_31 = arith.constant 0 : index
    %c0_32 = arith.constant 0 : index
    %37 = vector.load %arg4[%c3, %c0_31, %c0_32] : memref<9x1x512xf32, #tpu.memory_space<vmem>>, vector<1x1x512xf32>
    %38 = vector.shape_cast %37 : vector<1x1x512xf32> to vector<1x512xf32>
    %39 = vector.broadcast %38 : vector<1x512xf32> to vector<8x512xf32>
    %40 = arith.mulf %36, %39 : vector<8x512xf32>
    %41 = arith.truncf %40 : vector<8x512xf32> to vector<8x512xbf16>
    %c24 = arith.constant 24 : index
    %c0_33 = arith.constant 0 : index
    %42 = vector.load %arg9[%c24, %c0_33] : memref<80x512xbf16, #tpu.memory_space<vmem>>, vector<8x512xbf16>
    tpu.vector_store %arg9[%c24, %c0_33], %41 {strides = array<i32>} : memref<80x512xbf16, #tpu.memory_space<vmem>>, vector<8x512xbf16>,
    %c0_34 = arith.constant 0 : index
    %c128_35 = arith.constant 128 : index
    %43 = vector.load %arg8[%c0_34, %c128_35] : memref<8x768xf32, #tpu.memory_space<vmem>>, vector<8x512xf32>
    %44 = arith.truncf %43 : vector<8x512xf32> to vector<8x512xbf16>
    %c32 = arith.constant 32 : index
    %c0_36 = arith.constant 0 : index
    %45 = vector.load %arg9[%c32, %c0_36] : memref<80x512xbf16, #tpu.memory_space<vmem>>, vector<8x512xbf16>
    tpu.vector_store %arg9[%c32, %c0_36], %44 {strides = array<i32>} : memref<80x512xbf16, #tpu.memory_space<vmem>>, vector<8x512xbf16>,
    %c0_37 = arith.constant 0 : index
    %c129 = arith.constant 129 : index
    %46 = vector.load %arg8[%c0_37, %c129] : memref<8x768xf32, #tpu.memory_space<vmem>>, vector<8x512xf32>
    %c5 = arith.constant 5 : index
    %c0_38 = arith.constant 0 : index
    %c0_39 = arith.constant 0 : index
    %47 = vector.load %arg4[%c5, %c0_38, %c0_39] : memref<9x1x512xf32, #tpu.memory_space<vmem>>, vector<1x1x512xf32>
    %48 = vector.shape_cast %47 : vector<1x1x512xf32> to vector<1x512xf32>
    %49 = vector.broadcast %48 : vector<1x512xf32> to vector<8x512xf32>
    %50 = arith.mulf %46, %49 : vector<8x512xf32>
    %51 = arith.truncf %50 : vector<8x512xf32> to vector<8x512xbf16>
    %c40 = arith.constant 40 : index
    %c0_40 = arith.constant 0 : index
    %52 = vector.load %arg9[%c40, %c0_40] : memref<80x512xbf16, #tpu.memory_space<vmem>>, vector<8x512xbf16>
    tpu.vector_store %arg9[%c40, %c0_40], %51 {strides = array<i32>} : memref<80x512xbf16, #tpu.memory_space<vmem>>, vector<8x512xbf16>,
    %c0_41 = arith.constant 0 : index
    %c143 = arith.constant 143 : index
    %53 = vector.load %arg8[%c0_41, %c143] : memref<8x768xf32, #tpu.memory_space<vmem>>, vector<8x512xf32>
    %c6 = arith.constant 6 : index
    %c0_42 = arith.constant 0 : index
    %c0_43 = arith.constant 0 : index
    %54 = vector.load %arg4[%c6, %c0_42, %c0_43] : memref<9x1x512xf32, #tpu.memory_space<vmem>>, vector<1x1x512xf32>
    %55 = vector.shape_cast %54 : vector<1x1x512xf32> to vector<1x512xf32>
    %56 = vector.broadcast %55 : vector<1x512xf32> to vector<8x512xf32>
    %57 = arith.mulf %53, %56 : vector<8x512xf32>
    %58 = arith.truncf %57 : vector<8x512xf32> to vector<8x512xbf16>
    %c48 = arith.constant 48 : index
    %c0_44 = arith.constant 0 : index
    %59 = vector.load %arg9[%c48, %c0_44] : memref<80x512xbf16, #tpu.memory_space<vmem>>, vector<8x512xbf16>
    tpu.vector_store %arg9[%c48, %c0_44], %58 {strides = array<i32>} : memref<80x512xbf16, #tpu.memory_space<vmem>>, vector<8x512xbf16>,
    %c0_45 = arith.constant 0 : index
    %c144 = arith.constant 144 : index
    %60 = vector.load %arg8[%c0_45, %c144] : memref<8x768xf32, #tpu.memory_space<vmem>>, vector<8x512xf32>
    %c7 = arith.constant 7 : index
    %c0_46 = arith.constant 0 : index
    %c0_47 = arith.constant 0 : index
    %61 = vector.load %arg4[%c7, %c0_46, %c0_47] : memref<9x1x512xf32, #tpu.memory_space<vmem>>, vector<1x1x512xf32>
    %62 = vector.shape_cast %61 : vector<1x1x512xf32> to vector<1x512xf32>
    %63 = vector.broadcast %62 : vector<1x512xf32> to vector<8x512xf32>
    %64 = arith.mulf %60, %63 : vector<8x512xf32>
    %65 = arith.truncf %64 : vector<8x512xf32> to vector<8x512xbf16>
    %c56 = arith.constant 56 : index
    %c0_48 = arith.constant 0 : index
    %66 = vector.load %arg9[%c56, %c0_48] : memref<80x512xbf16, #tpu.memory_space<vmem>>, vector<8x512xbf16>
    tpu.vector_store %arg9[%c56, %c0_48], %65 {strides = array<i32>} : memref<80x512xbf16, #tpu.memory_space<vmem>>, vector<8x512xbf16>,
    %c0_49 = arith.constant 0 : index
    %c145 = arith.constant 145 : index
    %67 = vector.load %arg8[%c0_49, %c145] : memref<8x768xf32, #tpu.memory_space<vmem>>, vector<8x512xf32>
    %c8_50 = arith.constant 8 : index
    %c0_51 = arith.constant 0 : index
    %c0_52 = arith.constant 0 : index
    %68 = vector.load %arg4[%c8_50, %c0_51, %c0_52] : memref<9x1x512xf32, #tpu.memory_space<vmem>>, vector<1x1x512xf32>
    %69 = vector.shape_cast %68 : vector<1x1x512xf32> to vector<1x512xf32>
    %70 = vector.broadcast %69 : vector<1x512xf32> to vector<8x512xf32>
    %71 = arith.mulf %67, %70 : vector<8x512xf32>
    %72 = arith.truncf %71 : vector<8x512xf32> to vector<8x512xbf16>
    %c64 = arith.constant 64 : index
    %c0_53 = arith.constant 0 : index
    %73 = vector.load %arg9[%c64, %c0_53] : memref<80x512xbf16, #tpu.memory_space<vmem>>, vector<8x512xbf16>
    tpu.vector_store %arg9[%c64, %c0_53], %72 {strides = array<i32>} : memref<80x512xbf16, #tpu.memory_space<vmem>>, vector<8x512xbf16>,
    %cst_54 = arith.constant 1.000000e+00 : bf16
    %74 = vector.broadcast %cst_54 : bf16 to vector<8x512xbf16>
    %c72 = arith.constant 72 : index
    %c0_55 = arith.constant 0 : index
    %75 = vector.load %arg9[%c72, %c0_55] : memref<80x512xbf16, #tpu.memory_space<vmem>>, vector<8x512xbf16>
    tpu.vector_store %arg9[%c72, %c0_55], %74 {strides = array<i32>} : memref<80x512xbf16, #tpu.memory_space<vmem>>, vector<8x512xbf16>,
    %c0_56 = arith.constant 0 : index
    %c0_57 = arith.constant 0 : index
    %76 = vector.load %arg5[%c0_56, %c0_57] : memref<8x80xbf16, #tpu.memory_space<vmem>>, vector<8x80xbf16>
    %c0_58 = arith.constant 0 : index
    %c0_59 = arith.constant 0 : index
    %77 = vector.load %arg9[%c0_58, %c0_59] : memref<80x512xbf16, #tpu.memory_space<vmem>>, vector<80x512xbf16>
    %cst_60 = arith.constant dense<0.000000e+00> : vector<8x512xf32>
    %78 = tpu.matmul %76, %77, %cst_60 {dimension_numbers = #tpu.dot_dimension_numbers<[1], [0], [0], [1], [0, 0, 1, 1], [], []>} : vector<8x80xbf16>, vector<80x512xbf16>, vector<8x512xf32> -> vector<8x512xf32>
    %cst_61 = arith.constant 0.000000e+00 : f32
    %79 = vector.broadcast %cst_61 : f32 to vector<8x512xf32>
    %80 = arith.cmpf oge, %78, %79 : vector<8x512xf32>
    %cst_62 = arith.constant 1.000000e-01 : f32
    %81 = vector.broadcast %cst_62 : f32 to vector<8x512xf32>
    %82 = arith.mulf %81, %78 : vector<8x512xf32>
    %83 = arith.select %80, %78, %82 : vector<8x512xi1>, vector<8x512xf32>
    %c0_63 = arith.constant 0 : index
    %c128_64 = arith.constant 128 : index
    %84 = vector.load %arg8[%c0_63, %c128_64] : memref<8x768xf32, #tpu.memory_space<vmem>>, vector<8x512xf32>
    tpu.vector_store %arg8[%c0_63, %c128_64], %83 {strides = array<i32>} : memref<8x768xf32, #tpu.memory_space<vmem>>, vector<8x512xf32>,
    %c0_65 = arith.constant 0 : index
    %c111_66 = arith.constant 111 : index
    %85 = vector.load %arg8[%c0_65, %c111_66] : memref<8x768xf32, #tpu.memory_space<vmem>>, vector<8x512xf32>
    %c0_67 = arith.constant 0 : index
    %c0_68 = arith.constant 0 : index
    %c0_69 = arith.constant 0 : index
    %86 = vector.load %arg4[%c0_67, %c0_68, %c0_69] : memref<9x1x512xf32, #tpu.memory_space<vmem>>, vector<1x1x512xf32>
    %87 = vector.shape_cast %86 : vector<1x1x512xf32> to vector<1x512xf32>
    %88 = vector.broadcast %87 : vector<1x512xf32> to vector<8x512xf32>
    %89 = arith.mulf %85, %88 : vector<8x512xf32>
    %90 = arith.truncf %89 : vector<8x512xf32> to vector<8x512xbf16>
    %c0_70 = arith.constant 0 : index
    %c0_71 = arith.constant 0 : index
    %91 = vector.load %arg9[%c0_70, %c0_71] : memref<80x512xbf16, #tpu.memory_space<vmem>>, vector<8x512xbf16>
    tpu.vector_store %arg9[%c0_70, %c0_71], %90 {strides = array<i32>} : memref<80x512xbf16, #tpu.memory_space<vmem>>, vector<8x512xbf16>,
    %c0_72 = arith.constant 0 : index
    %c112_73 = arith.constant 112 : index
    %92 = vector.load %arg8[%c0_72, %c112_73] : memref<8x768xf32, #tpu.memory_space<vmem>>, vector<8x512xf32>
    %c1_74 = arith.constant 1 : index
    %c0_75 = arith.constant 0 : index
    %c0_76 = arith.constant 0 : index
    %93 = vector.load %arg4[%c1_74, %c0_75, %c0_76] : memref<9x1x512xf32, #tpu.memory_space<vmem>>, vector<1x1x512xf32>
    %94 = vector.shape_cast %93 : vector<1x1x512xf32> to vector<1x512xf32>
    %95 = vector.broadcast %94 : vector<1x512xf32> to vector<8x512xf32>
    %96 = arith.mulf %92, %95 : vector<8x512xf32>
    %97 = arith.truncf %96 : vector<8x512xf32> to vector<8x512xbf16>
    %c8_77 = arith.constant 8 : index
    %c0_78 = arith.constant 0 : index
    %98 = vector.load %arg9[%c8_77, %c0_78] : memref<80x512xbf16, #tpu.memory_space<vmem>>, vector<8x512xbf16>
    tpu.vector_store %arg9[%c8_77, %c0_78], %97 {strides = array<i32>} : memref<80x512xbf16, #tpu.memory_space<vmem>>, vector<8x512xbf16>,
    %c0_79 = arith.constant 0 : index
    %c113_80 = arith.constant 113 : index
    %99 = vector.load %arg8[%c0_79, %c113_80] : memref<8x768xf32, #tpu.memory_space<vmem>>, vector<8x512xf32>
    %c2_81 = arith.constant 2 : index
    %c0_82 = arith.constant 0 : index
    %c0_83 = arith.constant 0 : index
    %100 = vector.load %arg4[%c2_81, %c0_82, %c0_83] : memref<9x1x512xf32, #tpu.memory_space<vmem>>, vector<1x1x512xf32>
    %101 = vector.shape_cast %100 : vector<1x1x512xf32> to vector<1x512xf32>
    %102 = vector.broadcast %101 : vector<1x512xf32> to vector<8x512xf32>
    %103 = arith.mulf %99, %102 : vector<8x512xf32>
    %104 = arith.truncf %103 : vector<8x512xf32> to vector<8x512xbf16>
    %c16_84 = arith.constant 16 : index
    %c0_85 = arith.constant 0 : index
    %105 = vector.load %arg9[%c16_84, %c0_85] : memref<80x512xbf16, #tpu.memory_space<vmem>>, vector<8x512xbf16>
    tpu.vector_store %arg9[%c16_84, %c0_85], %104 {strides = array<i32>} : memref<80x512xbf16, #tpu.memory_space<vmem>>, vector<8x512xbf16>,
    %c0_86 = arith.constant 0 : index
    %c127_87 = arith.constant 127 : index
    %106 = vector.load %arg8[%c0_86, %c127_87] : memref<8x768xf32, #tpu.memory_space<vmem>>, vector<8x512xf32>
    %c3_88 = arith.constant 3 : index
    %c0_89 = arith.constant 0 : index
    %c0_90 = arith.constant 0 : index
    %107 = vector.load %arg4[%c3_88, %c0_89, %c0_90] : memref<9x1x512xf32, #tpu.memory_space<vmem>>, vector<1x1x512xf32>
    %108 = vector.shape_cast %107 : vector<1x1x512xf32> to vector<1x512xf32>
    %109 = vector.broadcast %108 : vector<1x512xf32> to vector<8x512xf32>
    %110 = arith.mulf %106, %109 : vector<8x512xf32>
    %111 = arith.truncf %110 : vector<8x512xf32> to vector<8x512xbf16>
    %c24_91 = arith.constant 24 : index
    %c0_92 = arith.constant 0 : index
    %112 = vector.load %arg9[%c24_91, %c0_92] : memref<80x512xbf16, #tpu.memory_space<vmem>>, vector<8x512xbf16>
    tpu.vector_store %arg9[%c24_91, %c0_92], %111 {strides = array<i32>} : memref<80x512xbf16, #tpu.memory_space<vmem>>, vector<8x512xbf16>,
    %c0_93 = arith.constant 0 : index
    %c128_94 = arith.constant 128 : index
    %113 = vector.load %arg8[%c0_93, %c128_94] : memref<8x768xf32, #tpu.memory_space<vmem>>, vector<8x512xf32>
    %114 = arith.truncf %113 : vector<8x512xf32> to vector<8x512xbf16>
    %c32_95 = arith.constant 32 : index
    %c0_96 = arith.constant 0 : index
    %115 = vector.load %arg9[%c32_95, %c0_96] : memref<80x512xbf16, #tpu.memory_space<vmem>>, vector<8x512xbf16>
    tpu.vector_store %arg9[%c32_95, %c0_96], %114 {strides = array<i32>} : memref<80x512xbf16, #tpu.memory_space<vmem>>, vector<8x512xbf16>,
    %c0_97 = arith.constant 0 : index
    %c129_98 = arith.constant 129 : index
    %116 = vector.load %arg8[%c0_97, %c129_98] : memref<8x768xf32, #tpu.memory_space<vmem>>, vector<8x512xf32>
    %c5_99 = arith.constant 5 : index
    %c0_100 = arith.constant 0 : index
    %c0_101 = arith.constant 0 : index
    %117 = vector.load %arg4[%c5_99, %c0_100, %c0_101] : memref<9x1x512xf32, #tpu.memory_space<vmem>>, vector<1x1x512xf32>
    %118 = vector.shape_cast %117 : vector<1x1x512xf32> to vector<1x512xf32>
    %119 = vector.broadcast %118 : vector<1x512xf32> to vector<8x512xf32>
    %120 = arith.mulf %116, %119 : vector<8x512xf32>
    %121 = arith.truncf %120 : vector<8x512xf32> to vector<8x512xbf16>
    %c40_102 = arith.constant 40 : index
    %c0_103 = arith.constant 0 : index
    %122 = vector.load %arg9[%c40_102, %c0_103] : memref<80x512xbf16, #tpu.memory_space<vmem>>, vector<8x512xbf16>
    tpu.vector_store %arg9[%c40_102, %c0_103], %121 {strides = array<i32>} : memref<80x512xbf16, #tpu.memory_space<vmem>>, vector<8x512xbf16>,
    %c0_104 = arith.constant 0 : index
    %c143_105 = arith.constant 143 : index
    %123 = vector.load %arg8[%c0_104, %c143_105] : memref<8x768xf32, #tpu.memory_space<vmem>>, vector<8x512xf32>
    %c6_106 = arith.constant 6 : index
    %c0_107 = arith.constant 0 : index
    %c0_108 = arith.constant 0 : index
    %124 = vector.load %arg4[%c6_106, %c0_107, %c0_108] : memref<9x1x512xf32, #tpu.memory_space<vmem>>, vector<1x1x512xf32>
    %125 = vector.shape_cast %124 : vector<1x1x512xf32> to vector<1x512xf32>
    %126 = vector.broadcast %125 : vector<1x512xf32> to vector<8x512xf32>
    %127 = arith.mulf %123, %126 : vector<8x512xf32>
    %128 = arith.truncf %127 : vector<8x512xf32> to vector<8x512xbf16>
    %c48_109 = arith.constant 48 : index
    %c0_110 = arith.constant 0 : index
    %129 = vector.load %arg9[%c48_109, %c0_110] : memref<80x512xbf16, #tpu.memory_space<vmem>>, vector<8x512xbf16>
    tpu.vector_store %arg9[%c48_109, %c0_110], %128 {strides = array<i32>} : memref<80x512xbf16, #tpu.memory_space<vmem>>, vector<8x512xbf16>,
    %c0_111 = arith.constant 0 : index
    %c144_112 = arith.constant 144 : index
    %130 = vector.load %arg8[%c0_111, %c144_112] : memref<8x768xf32, #tpu.memory_space<vmem>>, vector<8x512xf32>
    %c7_113 = arith.constant 7 : index
    %c0_114 = arith.constant 0 : index
    %c0_115 = arith.constant 0 : index
    %131 = vector.load %arg4[%c7_113, %c0_114, %c0_115] : memref<9x1x512xf32, #tpu.memory_space<vmem>>, vector<1x1x512xf32>
    %132 = vector.shape_cast %131 : vector<1x1x512xf32> to vector<1x512xf32>
    %133 = vector.broadcast %132 : vector<1x512xf32> to vector<8x512xf32>
    %134 = arith.mulf %130, %133 : vector<8x512xf32>
    %135 = arith.truncf %134 : vector<8x512xf32> to vector<8x512xbf16>
    %c56_116 = arith.constant 56 : index
    %c0_117 = arith.constant 0 : index
    %136 = vector.load %arg9[%c56_116, %c0_117] : memref<80x512xbf16, #tpu.memory_space<vmem>>, vector<8x512xbf16>
    tpu.vector_store %arg9[%c56_116, %c0_117], %135 {strides = array<i32>} : memref<80x512xbf16, #tpu.memory_space<vmem>>, vector<8x512xbf16>,
    %c0_118 = arith.constant 0 : index
    %c145_119 = arith.constant 145 : index
    %137 = vector.load %arg8[%c0_118, %c145_119] : memref<8x768xf32, #tpu.memory_space<vmem>>, vector<8x512xf32>
    %c8_120 = arith.constant 8 : index
    %c0_121 = arith.constant 0 : index
    %c0_122 = arith.constant 0 : index
    %138 = vector.load %arg4[%c8_120, %c0_121, %c0_122] : memref<9x1x512xf32, #tpu.memory_space<vmem>>, vector<1x1x512xf32>
    %139 = vector.shape_cast %138 : vector<1x1x512xf32> to vector<1x512xf32>
    %140 = vector.broadcast %139 : vector<1x512xf32> to vector<8x512xf32>
    %141 = arith.mulf %137, %140 : vector<8x512xf32>
    %142 = arith.truncf %141 : vector<8x512xf32> to vector<8x512xbf16>
    %c64_123 = arith.constant 64 : index
    %c0_124 = arith.constant 0 : index
    %143 = vector.load %arg9[%c64_123, %c0_124] : memref<80x512xbf16, #tpu.memory_space<vmem>>, vector<8x512xbf16>
    tpu.vector_store %arg9[%c64_123, %c0_124], %142 {strides = array<i32>} : memref<80x512xbf16, #tpu.memory_space<vmem>>, vector<8x512xbf16>,
    %cst_125 = arith.constant 1.000000e+00 : bf16
    %144 = vector.broadcast %cst_125 : bf16 to vector<8x512xbf16>
    %c72_126 = arith.constant 72 : index
    %c0_127 = arith.constant 0 : index
    %145 = vector.load %arg9[%c72_126, %c0_127] : memref<80x512xbf16, #tpu.memory_space<vmem>>, vector<8x512xbf16>
    tpu.vector_store %arg9[%c72_126, %c0_127], %144 {strides = array<i32>} : memref<80x512xbf16, #tpu.memory_space<vmem>>, vector<8x512xbf16>,
    %c0_128 = arith.constant 0 : index
    %c0_129 = arith.constant 0 : index
    %146 = vector.load %arg6[%c0_128, %c0_129] : memref<4x80xbf16, #tpu.memory_space<vmem>>, vector<4x80xbf16>
    %c0_130 = arith.constant 0 : index
    %c0_131 = arith.constant 0 : index
    %147 = vector.load %arg9[%c0_130, %c0_131] : memref<80x512xbf16, #tpu.memory_space<vmem>>, vector<80x512xbf16>
    %cst_132 = arith.constant dense<0.000000e+00> : vector<4x512xf32>
    %148 = tpu.matmul %146, %147, %cst_132 {dimension_numbers = #tpu.dot_dimension_numbers<[1], [0], [0], [1], [0, 0, 1, 1], [], []>} : vector<4x80xbf16>, vector<80x512xbf16>, vector<4x512xf32> -> vector<4x512xf32>
    %cst_133 = arith.constant 0.000000e+00 : f32
    %149 = vector.broadcast %cst_133 : f32 to vector<4x512xf32>
    %150 = arith.cmpf oge, %148, %149 : vector<4x512xf32>
    %cst_134 = arith.constant 1.000000e-01 : f32
    %151 = vector.broadcast %cst_134 : f32 to vector<4x512xf32>
    %152 = arith.mulf %151, %148 : vector<4x512xf32>
    %153 = arith.select %150, %148, %152 : vector<4x512xi1>, vector<4x512xf32>
    %c0_135 = arith.constant 0 : index
    %c0_136 = arith.constant 0 : index
    %154 = vector.load %arg7[%c0_135, %c0_136] : memref<4x512xf32, #tpu.memory_space<vmem>>, vector<4x512xf32>
    tpu.vector_store %arg7[%c0_135, %c0_136], %153 {strides = array<i32>} : memref<4x512xf32, #tpu.memory_space<vmem>>, vector<4x512xf32>,
    return
  }
  func.func @transform_0(%arg0: i32) -> (i32, i32, i32) {
    %c0_i32 = arith.constant 0 : i32
    %c0_i32_0 = arith.constant 0 : i32
    %c0_i32_1 = arith.constant 0 : i32
    return %arg0, %c0_i32, %c0_i32_0 : i32, i32, i32
  }
  func.func @transform_1(%arg0: i32) -> (i32, i32) {
    %c0_i32 = arith.constant 0 : i32
    %c0_i32_0 = arith.constant 0 : i32
    return %c0_i32, %arg0 : i32, i32
  }
  func.func @transform_2(%arg0: i32) -> (i32, i32) {
    %c0_i32 = arith.constant 0 : i32
    %c0_i32_0 = arith.constant 0 : i32
    %c0_i32_1 = arith.constant 0 : i32
    return %c0_i32, %c0_i32_0 : i32, i32
  }
  func.func @transform_3(%arg0: i32) -> (i32, i32, i32) {
    %c0_i32 = arith.constant 0 : i32
    %c0_i32_0 = arith.constant 0 : i32
    %c0_i32_1 = arith.constant 0 : i32
    %c0_i32_2 = arith.constant 0 : i32
    return %c0_i32, %c0_i32_0, %c0_i32_1 : i32, i32, i32
  }
  func.func @transform_4(%arg0: i32) -> (i32, i32) {
    %c0_i32 = arith.constant 0 : i32
    %c0_i32_0 = arith.constant 0 : i32
    %c0_i32_1 = arith.constant 0 : i32
    return %c0_i32, %c0_i32_0 : i32, i32
  }
  func.func @transform_5(%arg0: i32) -> (i32, i32) {
    %c0_i32 = arith.constant 0 : i32
    %c0_i32_0 = arith.constant 0 : i32
    %c0_i32_1 = arith.constant 0 : i32
    return %c0_i32, %c0_i32_0 : i32, i32
  }
  func.func @transform_6(%arg0: i32) -> (i32, i32) {
    %c0_i32 = arith.constant 0 : i32
    %c0_i32_0 = arith.constant 0 : i32
    return %c0_i32, %arg0 : i32, i32
  }
}

</mosaic_0001>

<llo_original>
// kernel: up_simple_forward.1
$region0: #{up_simple_forward.1}
  #allocation0 [shape = 'u32[]', space=smem, size = 0x4, offset = 0x4, fixed_abs, tag = 'smem constant byte address 0x4 - core index']
  #allocation1 [shape = 'u32[144,128]{1,0:T(1,128)}', space=vmem, size = 0x12000, scoped, tag = 'internal scratch']
  #allocation2 [shape = 'f32[8,768]{1,0:T(8,128)}', space=vmem, size = 0x6000, scoped, tag = 'scratch operand']
  #allocation3 [shape = 'bf16[80,512]{1,0:T(16,128)(2,1)}', space=vmem, size = 0x14000, scoped, tag = 'scratch operand']
  %s0 = inlined_call_operand.vmem [shape: f32[2,4,64], index: 0, kind: input, shape index: {}]
  %s1 = inlined_call_operand.vmem [shape: f32[4,512], index: 1, kind: input, shape index: {}]
  %s2 = inlined_call_operand.vmem [shape: bf16[64,256], index: 2, kind: input, shape index: {}]
  %s3 = inlined_call_operand.vmem [shape: f32[9,1,512], index: 3, kind: input, shape index: {}]
  %s4 = inlined_call_operand.vmem [shape: bf16[8,80], index: 4, kind: input, shape index: {}]
  %s5 = inlined_call_operand.vmem [shape: bf16[4,80], index: 5, kind: input, shape index: {}]
  %s6 = inlined_call_operand.vmem [shape: f32[4,512], index: 6, kind: output, shape index: {}]
  %s7 = sld [smem:[#allocation0]]
  $region34: #{up_simple_forward.1} parent=0
    _
  %s9 = ssub.s32 1, %s7
  %s10 = scalar_select 0, %s9, %s7
  // Predicated region
  $region2: #{up_simple_forward.1} parent=0 // pred_check
    _
  $region3: #{up_simple_forward.1} parent=0 // pred_check_branch
    %12 = sbr.rel (0) target = $region5
  $region4: #{up_simple_forward.1} parent=0 // pred_region
    _
  $region5: #{up_simple_forward.1} parent=0 // pred_fallthru
    _
  // Predicated region
  $region6: #{up_simple_forward.1} parent=0 // pred_check
    _
  $region7: #{up_simple_forward.1} parent=0 // pred_check_branch
    %14 = sbr.rel (0) target = $region9
  $region8: #{up_simple_forward.1} parent=0 // pred_region
    _
  $region9: #{up_simple_forward.1} parent=0 // pred_fallthru
    _
  // Predicated region
  $region10: #{up_simple_forward.1} parent=0 // pred_check
    _
  $region11: #{up_simple_forward.1} parent=0 // pred_check_branch
    %16 = sbr.rel (0) target = $region13
  $region12: #{up_simple_forward.1} parent=0 // pred_region
    _
  $region13: #{up_simple_forward.1} parent=0 // pred_fallthru
    _
  // Predicated region
  $region14: #{up_simple_forward.1} parent=0 // pred_check
    _
  $region15: #{up_simple_forward.1} parent=0 // pred_check_branch
    %18 = sbr.rel (0) target = $region17
  $region16: #{up_simple_forward.1} parent=0 // pred_region
    _
  $region17: #{up_simple_forward.1} parent=0 // pred_fallthru
    _
  // Predicated region
  $region18: #{up_simple_forward.1} parent=0 // pred_check
    _
  $region19: #{up_simple_forward.1} parent=0 // pred_check_branch
    %20 = sbr.rel (0) target = $region21
  $region20: #{up_simple_forward.1} parent=0 // pred_region
    _
  $region21: #{up_simple_forward.1} parent=0 // pred_fallthru
    _
  // Predicated region
  $region22: #{up_simple_forward.1} parent=0 // pred_check
    _
  $region23: #{up_simple_forward.1} parent=0 // pred_check_branch
    %22 = sbr.rel (0) target = $region25
  $region24: #{up_simple_forward.1} parent=0 // pred_region
    _
  $region25: #{up_simple_forward.1} parent=0 // pred_fallthru
    _
  %25 = vst [vmem:[#allocation2] sm:$0xff] 0.0
  %26 = vst [vmem:[#allocation2 + $0x8] sm:$0xff] 0.0
  %27 = vst [vmem:[#allocation2 + $0x10] sm:$0xff] 0.0
  %28 = vst [vmem:[#allocation2 + $0x18] sm:$0xff] 0.0
  %29 = vst [vmem:[#allocation2 + $0x20] sm:$0xff] 0.0
  %30 = vst [vmem:[#allocation2 + $0x28] sm:$0xff] 0.0
  %v31 = vld [vmem:[%s1] sm:$0xff]
  %v32 = vld [vmem:[%s1 + $0x8] sm:$0xff]
  %v35 = vcombine.high %v31, %v31
  %v36 = vcombine.high %v32, %v32
  %39 = vst [vmem:[#allocation2 + $0x8] sm:$0xf] %v31
  %40 = vst [vmem:[#allocation2 + $0x10] sm:$0xf] %v35
  %41 = vst [vmem:[#allocation2 + $0x18] sm:$0xf] %v32
  %42 = vst [vmem:[#allocation2 + $0x20] sm:$0xf] %v36
  %v43 = vld [vmem:[%s2] sm:$0xff]
  %v44 = vld [vmem:[%s2 + $0x8] sm:$0xff]
  %v45 = vld [vmem:[%s2 + $0x10] sm:$0xff]
  %v46 = vld [vmem:[%s2 + $0x18] sm:$0xff]
  %v47 = vld [vmem:[%s2 + $0x20] sm:$0xff]
  %v48 = vld [vmem:[%s2 + $0x28] sm:$0xff]
  %v49 = vld [vmem:[%s2 + $0x30] sm:$0xff]
  %v50 = vld [vmem:[%s2 + $0x38] sm:$0xff]
  %v51 = vld [vmem:[%s0] sm:$0xf]
  %v52 = vpack.c.bf16 %v51, %v51
  %v61 = vunpack.c.l.b16 %v43
  %v62 = vunpack.c.h.b16 %v43
  %v63 = vunpack.c.l.b16 %v44
  %v64 = vunpack.c.h.b16 %v44
  %v65 = vunpack.c.l.b16 %v45
  %v66 = vunpack.c.h.b16 %v45
  %v67 = vunpack.c.l.b16 %v46
  %v68 = vunpack.c.h.b16 %v46
  %v69 = vunpack.c.l.b16 %v47
  %v70 = vunpack.c.h.b16 %v47
  %v71 = vunpack.c.l.b16 %v48
  %v72 = vunpack.c.h.b16 %v48
  %v73 = vunpack.c.l.b16 %v49
  %v74 = vunpack.c.h.b16 %v49
  %v75 = vunpack.c.l.b16 %v50
  %v76 = vunpack.c.h.b16 %v50
  %v77 = vpack.c.b16 %v63, %v61
  %v78 = vpack.c.b16 %v64, %v62
  %v79 = vpack.c.b16 %v67, %v65
  %v80 = vpack.c.b16 %v68, %v66
  %v81 = vpack.c.b16 %v71, %v69
  %v82 = vpack.c.b16 %v72, %v70
  %v83 = vpack.c.b16 %v75, %v73
  %v84 = vpack.c.b16 %v76, %v74
  %vm93 = vcmask 523264
  %v95 = vsel %vm93, %v52, 0
  %97 = vmatprep.subr.bf16.mxu0 %v78
  %98 = vmatpush1.bf16.msra.mxu0 %v77
  %99 = vmatprep.subr.bf16.mxu0 %v80
  %100 = vmatpush1.bf16.msra.mxu0 %v79
  %101 = vmatprep.subr.bf16.mxu0 %v82
  %102 = vmatpush1.bf16.msra.mxu0 %v81
  %103 = vmatprep.subr.bf16.mxu0 %v84
  %104 = vmatpush1.bf16.msra.mxu0 %v83
  %105 = vmatprep.subr.bf16.mxu0 0
  %106 = vmatpush1.bf16.msra.mxu0 0
  %107 = vmatprep.subr.bf16.mxu0 0
  %108 = vmatpush1.bf16.msra.mxu0 0
  %109 = vmatprep.subr.bf16.mxu0 0
  %110 = vmatpush1.bf16.msra.mxu0 0
  %111 = vmatprep.subr.bf16.mxu0 0
  %112 = vmatpush1.bf16.msra.mxu0 0
  %113 = vmatprep.subr.bf16.mxu0 0
  %114 = vmatpush1.bf16.msra.mxu0 0
  %115 = vmatprep.subr.bf16.mxu0 0
  %116 = vmatpush1.bf16.msra.mxu0 0
  %117 = vmatprep.subr.bf16.mxu0 0
  %118 = vmatpush1.bf16.msra.mxu0 0
  %119 = vmatprep.subr.bf16.mxu0 0
  %120 = vmatpush1.bf16.msra.mxu0 0
  %121 = vmatprep.subr.bf16.mxu0 0
  %122 = vmatpush1.bf16.msra.mxu0 0
  %123 = vmatprep.subr.bf16.mxu0 0
  %124 = vmatpush1.bf16.msra.mxu0 0
  %125 = vmatprep.subr.bf16.mxu0 0
  %126 = vmatpush1.bf16.msra.mxu0 0
  %127 = vmatprep.subr.bf16.mxu0 0
  %128 = vmatpush1.bf16.msra.mxu0 0
  %129 = vmatprep.mubr.bf16.mxu0 0
  %130 = vmatmul.mubr.bf16.gmra.mrb[0].mxu0 %v95
  %v131 = vpop.f32.mrb[0].mxu0
  %v132 = vadd.f32 0.0, %v131
  %v133 = vpop.f32.mrb[0].mxu0
  %v134 = vadd.f32 0.0, %v133
  %v135 = vpop.f32.mrb[0].mxu0
  %v136 = vpop.f32.mrb[0].mxu0
  %137 = vdwg.mxu0
  %v140 = vrot.slane %v132, 4
  %v141 = vrot.slane %v134, 4
  %144 = vst [vmem:[#allocation2 + $0x8] sm:$0xf0] %v140
  %145 = vst [vmem:[#allocation2 + $0x10] sm:$0xf0] %v141
  %s146 = scalar_lea.vmem %s0, 4
  %v147 = vld [vmem:[%s146] sm:$0xf]
  %v148 = vpack.c.bf16 %v147, %v147
  %v150 = vsel %vm93, %v148, 0
  %152 = vmatprep.subr.bf16.mxu0 %v78
  %153 = vmatpush1.bf16.msra.mxu0 %v77
  %154 = vmatprep.subr.bf16.mxu0 %v80
  %155 = vmatpush1.bf16.msra.mxu0 %v79
  %156 = vmatprep.subr.bf16.mxu0 %v82
  %157 = vmatpush1.bf16.msra.mxu0 %v81
  %158 = vmatprep.subr.bf16.mxu0 %v84
  %159 = vmatpush1.bf16.msra.mxu0 %v83
  %160 = vmatprep.subr.bf16.mxu0 0
  %161 = vmatpush1.bf16.msra.mxu0 0
  %162 = vmatprep.subr.bf16.mxu0 0
  %163 = vmatpush1.bf16.msra.mxu0 0
  %164 = vmatprep.subr.bf16.mxu0 0
  %165 = vmatpush1.bf16.msra.mxu0 0
  %166 = vmatprep.subr.bf16.mxu0 0
  %167 = vmatpush1.bf16.msra.mxu0 0
  %168 = vmatprep.subr.bf16.mxu0 0
  %169 = vmatpush1.bf16.msra.mxu0 0
  %170 = vmatprep.subr.bf16.mxu0 0
  %171 = vmatpush1.bf16.msra.mxu0 0
  %172 = vmatprep.subr.bf16.mxu0 0
  %173 = vmatpush1.bf16.msra.mxu0 0
  %174 = vmatprep.subr.bf16.mxu0 0
  %175 = vmatpush1.bf16.msra.mxu0 0
  %176 = vmatprep.subr.bf16.mxu0 0
  %177 = vmatpush1.bf16.msra.mxu0 0
  %178 = vmatprep.subr.bf16.mxu0 0
  %179 = vmatpush1.bf16.msra.mxu0 0
  %180 = vmatprep.subr.bf16.mxu0 0
  %181 = vmatpush1.bf16.msra.mxu0 0
  %182 = vmatprep.subr.bf16.mxu0 0
  %183 = vmatpush1.bf16.msra.mxu0 0
  %184 = vmatprep.mubr.bf16.mxu0 0
  %185 = vmatmul.mubr.bf16.gmra.mrb[0].mxu0 %v150
  %v186 = vpop.f32.mrb[0].mxu0
  %v187 = vadd.f32 0.0, %v186
  %v188 = vpop.f32.mrb[0].mxu0
  %v189 = vadd.f32 0.0, %v188
  %v190 = vpop.f32.mrb[0].mxu0
  %v191 = vpop.f32.mrb[0].mxu0
  %192 = vdwg.mxu0
  %v195 = vrot.slane %v187, 4
  %v196 = vrot.slane %v189, 4
  %199 = vst [vmem:[#allocation2 + $0x18] sm:$0xf0] %v195
  %200 = vst [vmem:[#allocation2 + $0x20] sm:$0xf0] %v196
  %v201 = vld [vmem:[#allocation2] sm:$0xff]
  %v202 = vld [vmem:[#allocation2 + $0x8] sm:$0xff]
  %v203 = vld [vmem:[#allocation2 + $0x10] sm:$0xff]
  %v204 = vld [vmem:[#allocation2 + $0x18] sm:$0xff]
  %v205 = vld [vmem:[#allocation2 + $0x20] sm:$0xff]
  %v206 = vld [vmem:[%s3] sm:$0xf]
  %v208 = vlaneseq
  %v209 = vshrl.u32 %v208, 7
  %v210 = vsub.s32 0, %v209
  %v211 = vrot.slane %v206, %v210
  %v212 = vlaneseq
  %v213 = vshrl.u32 %v212, 7
  %v214 = vsub.s32 1, %v213
  %v215 = vrot.slane %v206, %v214
  %v216 = vlaneseq
  %v217 = vshrl.u32 %v216, 7
  %v218 = vsub.s32 2, %v217
  %v219 = vrot.slane %v206, %v218
  %v220 = vlaneseq
  %v221 = vshrl.u32 %v220, 7
  %v222 = vsub.s32 3, %v221
  %v223 = vrot.slane %v206, %v222
  %224 = vrot.lane.b32.xlu0 %v211, 111
  %v225 = vpop.permute.xlu0 %224
  %226 = vrot.lane.b32.xlu0 %v215, 111
  %v227 = vpop.permute.xlu0 %226
  %228 = vrot.lane.b32.xlu0 %v219, 111
  %v229 = vpop.permute.xlu0 %228
  %230 = vrot.lane.b32.xlu0 %v223, 111
  %v231 = vpop.permute.xlu0 %230
  %vm232 = vcmask 908288
  %v233 = vsel %vm232, %v225, %v227
  %v234 = vsel %vm232, %v227, %v229
  %v235 = vsel %vm232, %v229, %v231
  %v241 = vmul.f32 %v201, %v225
  %v242 = vmul.f32 %v202, %v233
  %v243 = vmul.f32 %v203, %v234
  %v244 = vmul.f32 %v204, %v235
  %v245 = vmul.f32 %v205, %v231
  %v246 = vpack.c.bf16 %v241, %v241
  %v247 = vpack.c.bf16 %v242, %v242
  %v248 = vpack.c.bf16 %v243, %v243
  %v249 = vpack.c.bf16 %v244, %v244
  %v250 = vpack.c.bf16 %v245, %v245
  %256 = vrot.lane.b32.xlu0 %v246, 17
  %v257 = vpop.permute.xlu0 %256
  %258 = vrot.lane.b32.xlu0 %v247, 17
  %v259 = vpop.permute.xlu0 %258
  %260 = vrot.lane.b32.xlu0 %v248, 17
  %v261 = vpop.permute.xlu0 %260
  %262 = vrot.lane.b32.xlu0 %v249, 17
  %v263 = vpop.permute.xlu0 %262
  %264 = vrot.lane.b32.xlu0 %v250, 17
  %v265 = vpop.permute.xlu0 %264
  %vm266 = vcmask 138240
  %v267 = vsel %vm266, %v257, %v259
  %v268 = vsel %vm266, %v259, %v261
  %v269 = vsel %vm266, %v261, %v263
  %v270 = vsel %vm266, %v263, %v265
  %275 = vst [vmem:[#allocation3] sm:$0xf] %v267
  %276 = vst [vmem:[#allocation3 + $0x8] sm:$0xf] %v268
  %277 = vst [vmem:[#allocation3 + $0x10] sm:$0xf] %v269
  %278 = vst [vmem:[#allocation3 + $0x18] sm:$0xf] %v270
  %v279 = vld [vmem:[#allocation2] sm:$0xff]
  %v280 = vld [vmem:[#allocation2 + $0x8] sm:$0xff]
  %v281 = vld [vmem:[#allocation2 + $0x10] sm:$0xff]
  %v282 = vld [vmem:[#allocation2 + $0x18] sm:$0xff]
  %v283 = vld [vmem:[#allocation2 + $0x20] sm:$0xff]
  %s284 = scalar_lea.vmem %s3, 4
  %v285 = vld [vmem:[%s284] sm:$0xf]
  %v287 = vlaneseq
  %v288 = vshrl.u32 %v287, 7
  %v289 = vsub.s32 0, %v288
  %v290 = vrot.slane %v285, %v289
  %v291 = vlaneseq
  %v292 = vshrl.u32 %v291, 7
  %v293 = vsub.s32 1, %v292
  %v294 = vrot.slane %v285, %v293
  %v295 = vlaneseq
  %v296 = vshrl.u32 %v295, 7
  %v297 = vsub.s32 2, %v296
  %v298 = vrot.slane %v285, %v297
  %v299 = vlaneseq
  %v300 = vshrl.u32 %v299, 7
  %v301 = vsub.s32 3, %v300
  %v302 = vrot.slane %v285, %v301
  %303 = vrot.lane.b32.xlu0 %v290, 112
  %v304 = vpop.permute.xlu0 %303
  %305 = vrot.lane.b32.xlu0 %v294, 112
  %v306 = vpop.permute.xlu0 %305
  %307 = vrot.lane.b32.xlu0 %v298, 112
  %v308 = vpop.permute.xlu0 %307
  %309 = vrot.lane.b32.xlu0 %v302, 112
  %v310 = vpop.permute.xlu0 %309
  %vm311 = vcmask 916480
  %v312 = vsel %vm311, %v304, %v306
  %v313 = vsel %vm311, %v306, %v308
  %v314 = vsel %vm311, %v308, %v310
  %v320 = vmul.f32 %v279, %v304
  %v321 = vmul.f32 %v280, %v312
  %v322 = vmul.f32 %v281, %v313
  %v323 = vmul.f32 %v282, %v314
  %v324 = vmul.f32 %v283, %v310
  %v325 = vpack.c.bf16 %v320, %v320
  %v326 = vpack.c.bf16 %v321, %v321
  %v327 = vpack.c.bf16 %v322, %v322
  %v328 = vpack.c.bf16 %v323, %v323
  %v329 = vpack.c.bf16 %v324, %v324
  %v335 = vrot.slane %v325, 4
  %v336 = vrot.slane %v326, 4
  %v337 = vrot.slane %v327, 4
  %v338 = vrot.slane %v328, 4
  %v339 = vrot.slane %v329, 4
  %340 = vrot.lane.b32.xlu0 %v335, 16
  %v341 = vpop.permute.xlu0 %340
  %342 = vrot.lane.b32.xlu0 %v336, 16
  %v343 = vpop.permute.xlu0 %342
  %344 = vrot.lane.b32.xlu0 %v337, 16
  %v345 = vpop.permute.xlu0 %344
  %346 = vrot.lane.b32.xlu0 %v338, 16
  %v347 = vpop.permute.xlu0 %346
  %348 = vrot.lane.b32.xlu0 %v339, 16
  %v349 = vpop.permute.xlu0 %348
  %vm350 = vcmask 130048
  %v351 = vsel %vm350, %v341, %v343
  %v352 = vsel %vm350, %v343, %v345
  %v353 = vsel %vm350, %v345, %v347
  %v354 = vsel %vm350, %v347, %v349
  %359 = vst [vmem:[#allocation3] sm:$0xf0] %v351
  %360 = vst [vmem:[#allocation3 + $0x8] sm:$0xf0] %v352
  %361 = vst [vmem:[#allocation3 + $0x10] sm:$0xf0] %v353
  %362 = vst [vmem:[#allocation3 + $0x18] sm:$0xf0] %v354
  %v363 = vld [vmem:[#allocation2] sm:$0xff]
  %v364 = vld [vmem:[#allocation2 + $0x8] sm:$0xff]
  %v365 = vld [vmem:[#allocation2 + $0x10] sm:$0xff]
  %v366 = vld [vmem:[#allocation2 + $0x18] sm:$0xff]
  %v367 = vld [vmem:[#allocation2 + $0x20] sm:$0xff]
  %s368 = scalar_lea.vmem %s3, 8
  %v369 = vld [vmem:[%s368] sm:$0xf]
  %v371 = vlaneseq
  %v372 = vshrl.u32 %v371, 7
  %v373 = vsub.s32 0, %v372
  %v374 = vrot.slane %v369, %v373
  %v375 = vlaneseq
  %v376 = vshrl.u32 %v375, 7
  %v377 = vsub.s32 1, %v376
  %v378 = vrot.slane %v369, %v377
  %v379 = vlaneseq
  %v380 = vshrl.u32 %v379, 7
  %v381 = vsub.s32 2, %v380
  %v382 = vrot.slane %v369, %v381
  %v383 = vlaneseq
  %v384 = vshrl.u32 %v383, 7
  %v385 = vsub.s32 3, %v384
  %v386 = vrot.slane %v369, %v385
  %387 = vrot.lane.b32.xlu0 %v374, 113
  %v388 = vpop.permute.xlu0 %387
  %389 = vrot.lane.b32.xlu0 %v378, 113
  %v390 = vpop.permute.xlu0 %389
  %391 = vrot.lane.b32.xlu0 %v382, 113
  %v392 = vpop.permute.xlu0 %391
  %393 = vrot.lane.b32.xlu0 %v386, 113
  %v394 = vpop.permute.xlu0 %393
  %vm395 = vcmask 924672
  %v396 = vsel %vm395, %v388, %v390
  %v397 = vsel %vm395, %v390, %v392
  %v398 = vsel %vm395, %v392, %v394
  %v404 = vmul.f32 %v363, %v388
  %v405 = vmul.f32 %v364, %v396
  %v406 = vmul.f32 %v365, %v397
  %v407 = vmul.f32 %v366, %v398
  %v408 = vmul.f32 %v367, %v394
  %v409 = vpack.c.bf16 %v404, %v404
  %v410 = vpack.c.bf16 %v405, %v405
  %v411 = vpack.c.bf16 %v406, %v406
  %v412 = vpack.c.bf16 %v407, %v407
  %v413 = vpack.c.bf16 %v408, %v408
  %419 = vrot.lane.b32.xlu0 %v409, 15
  %v420 = vpop.permute.xlu0 %419
  %421 = vrot.lane.b32.xlu0 %v410, 15
  %v422 = vpop.permute.xlu0 %421
  %423 = vrot.lane.b32.xlu0 %v411, 15
  %v424 = vpop.permute.xlu0 %423
  %425 = vrot.lane.b32.xlu0 %v412, 15
  %v426 = vpop.permute.xlu0 %425
  %427 = vrot.lane.b32.xlu0 %v413, 15
  %v428 = vpop.permute.xlu0 %427
  %vm429 = vcmask 121856
  %v430 = vsel %vm429, %v420, %v422
  %v431 = vsel %vm429, %v422, %v424
  %v432 = vsel %vm429, %v424, %v426
  %v433 = vsel %vm429, %v426, %v428
  %438 = vst [vmem:[#allocation3 + $0x20] sm:$0xf] %v430
  %439 = vst [vmem:[#allocation3 + $0x28] sm:$0xf] %v431
  %440 = vst [vmem:[#allocation3 + $0x30] sm:$0xf] %v432
  %441 = vst [vmem:[#allocation3 + $0x38] sm:$0xf] %v433
  %v442 = vld [vmem:[#allocation2] sm:$0xff]
  %v443 = vld [vmem:[#allocation2 + $0x8] sm:$0xff]
  %v444 = vld [vmem:[#allocation2 + $0x10] sm:$0xff]
  %v445 = vld [vmem:[#allocation2 + $0x18] sm:$0xff]
  %v446 = vld [vmem:[#allocation2 + $0x20] sm:$0xff]
  %s447 = scalar_lea.vmem %s3, 12
  %v448 = vld [vmem:[%s447] sm:$0xf]
  %v450 = vlaneseq
  %v451 = vshrl.u32 %v450, 7
  %v452 = vsub.s32 0, %v451
  %v453 = vrot.slane %v448, %v452
  %v454 = vlaneseq
  %v455 = vshrl.u32 %v454, 7
  %v456 = vsub.s32 1, %v455
  %v457 = vrot.slane %v448, %v456
  %v458 = vlaneseq
  %v459 = vshrl.u32 %v458, 7
  %v460 = vsub.s32 2, %v459
  %v461 = vrot.slane %v448, %v460
  %v462 = vlaneseq
  %v463 = vshrl.u32 %v462, 7
  %v464 = vsub.s32 3, %v463
  %v465 = vrot.slane %v448, %v464
  %466 = vrot.lane.b32.xlu0 %v453, 127
  %v467 = vpop.permute.xlu0 %466
  %468 = vrot.lane.b32.xlu0 %v457, 127
  %v469 = vpop.permute.xlu0 %468
  %470 = vrot.lane.b32.xlu0 %v461, 127
  %v471 = vpop.permute.xlu0 %470
  %472 = vrot.lane.b32.xlu0 %v465, 127
  %v473 = vpop.permute.xlu0 %472
  %vm474 = vcmask 1039360
  %v475 = vsel %vm474, %v467, %v469
  %v476 = vsel %vm474, %v469, %v471
  %v477 = vsel %vm474, %v471, %v473
  %v483 = vmul.f32 %v442, %v467
  %v484 = vmul.f32 %v443, %v475
  %v485 = vmul.f32 %v444, %v476
  %v486 = vmul.f32 %v445, %v477
  %v487 = vmul.f32 %v446, %v473
  %v488 = vpack.c.bf16 %v483, %v483
  %v489 = vpack.c.bf16 %v484, %v484
  %v490 = vpack.c.bf16 %v485, %v485
  %v491 = vpack.c.bf16 %v486, %v486
  %v492 = vpack.c.bf16 %v487, %v487
  %v498 = vrot.slane %v488, 4
  %v499 = vrot.slane %v489, 4
  %v500 = vrot.slane %v490, 4
  %v501 = vrot.slane %v491, 4
  %v502 = vrot.slane %v492, 4
  %503 = vrot.lane.b32.xlu0 %v498, 1
  %v504 = vpop.permute.xlu0 %503
  %505 = vrot.lane.b32.xlu0 %v499, 1
  %v506 = vpop.permute.xlu0 %505
  %507 = vrot.lane.b32.xlu0 %v500, 1
  %v508 = vpop.permute.xlu0 %507
  %509 = vrot.lane.b32.xlu0 %v501, 1
  %v510 = vpop.permute.xlu0 %509
  %511 = vrot.lane.b32.xlu0 %v502, 1
  %v512 = vpop.permute.xlu0 %511
  %vm513 = vcmask 7168
  %v514 = vsel %vm513, %v504, %v506
  %v515 = vsel %vm513, %v506, %v508
  %v516 = vsel %vm513, %v508, %v510
  %v517 = vsel %vm513, %v510, %v512
  %522 = vst [vmem:[#allocation3 + $0x20] sm:$0xf0] %v514
  %523 = vst [vmem:[#allocation3 + $0x28] sm:$0xf0] %v515
  %524 = vst [vmem:[#allocation3 + $0x30] sm:$0xf0] %v516
  %525 = vst [vmem:[#allocation3 + $0x38] sm:$0xf0] %v517
  %v526 = vld [vmem:[#allocation2 + $0x8] sm:$0xff]
  %v527 = vld [vmem:[#allocation2 + $0x10] sm:$0xff]
  %v528 = vld [vmem:[#allocation2 + $0x18] sm:$0xff]
  %v529 = vld [vmem:[#allocation2 + $0x20] sm:$0xff]
  %v530 = vpack.c.bf16 %v526, %v526
  %v531 = vpack.c.bf16 %v527, %v527
  %v532 = vpack.c.bf16 %v528, %v528
  %v533 = vpack.c.bf16 %v529, %v529
  %534 = vst [vmem:[#allocation3 + $0x40] sm:$0xf] %v530
  %535 = vst [vmem:[#allocation3 + $0x48] sm:$0xf] %v531
  %536 = vst [vmem:[#allocation3 + $0x50] sm:$0xf] %v532
  %537 = vst [vmem:[#allocation3 + $0x58] sm:$0xf] %v533
  %v538 = vld [vmem:[#allocation2 + $0x8] sm:$0xff]
  %v539 = vld [vmem:[#allocation2 + $0x10] sm:$0xff]
  %v540 = vld [vmem:[#allocation2 + $0x18] sm:$0xff]
  %v541 = vld [vmem:[#allocation2 + $0x20] sm:$0xff]
  %v542 = vld [vmem:[#allocation2 + $0x28] sm:$0xff]
  %s543 = scalar_lea.vmem %s3, 20
  %v544 = vld [vmem:[%s543] sm:$0xf]
  %v546 = vlaneseq
  %v547 = vshrl.u32 %v546, 7
  %v548 = vsub.s32 0, %v547
  %v549 = vrot.slane %v544, %v548
  %v550 = vlaneseq
  %v551 = vshrl.u32 %v550, 7
  %v552 = vsub.s32 1, %v551
  %v553 = vrot.slane %v544, %v552
  %v554 = vlaneseq
  %v555 = vshrl.u32 %v554, 7
  %v556 = vsub.s32 2, %v555
  %v557 = vrot.slane %v544, %v556
  %v558 = vlaneseq
  %v559 = vshrl.u32 %v558, 7
  %v560 = vsub.s32 3, %v559
  %v561 = vrot.slane %v544, %v560
  %562 = vrot.lane.b32.xlu0 %v549, 1
  %v563 = vpop.permute.xlu0 %562
  %564 = vrot.lane.b32.xlu0 %v553, 1
  %v565 = vpop.permute.xlu0 %564
  %566 = vrot.lane.b32.xlu0 %v557, 1
  %v567 = vpop.permute.xlu0 %566
  %568 = vrot.lane.b32.xlu0 %v561, 1
  %v569 = vpop.permute.xlu0 %568
  %vm570 = vcmask 7168
  %v571 = vsel %vm570, %v563, %v565
  %v572 = vsel %vm570, %v565, %v567
  %v573 = vsel %vm570, %v567, %v569
  %v579 = vmul.f32 %v538, %v563
  %v580 = vmul.f32 %v539, %v571
  %v581 = vmul.f32 %v540, %v572
  %v582 = vmul.f32 %v541, %v573
  %v583 = vmul.f32 %v542, %v569
  %v584 = vpack.c.bf16 %v579, %v579
  %v585 = vpack.c.bf16 %v580, %v580
  %v586 = vpack.c.bf16 %v581, %v581
  %v587 = vpack.c.bf16 %v582, %v582
  %v588 = vpack.c.bf16 %v583, %v583
  %v594 = vrot.slane %v584, 4
  %v595 = vrot.slane %v585, 4
  %v596 = vrot.slane %v586, 4
  %v597 = vrot.slane %v587, 4
  %v598 = vrot.slane %v588, 4
  %599 = vrot.lane.b32.xlu0 %v594, 127
  %v600 = vpop.permute.xlu0 %599
  %601 = vrot.lane.b32.xlu0 %v595, 127
  %v602 = vpop.permute.xlu0 %601
  %603 = vrot.lane.b32.xlu0 %v596, 127
  %v604 = vpop.permute.xlu0 %603
  %605 = vrot.lane.b32.xlu0 %v597, 127
  %v606 = vpop.permute.xlu0 %605
  %607 = vrot.lane.b32.xlu0 %v598, 127
  %v608 = vpop.permute.xlu0 %607
  %vm609 = vcmask 1039360
  %v610 = vsel %vm609, %v600, %v602
  %v611 = vsel %vm609, %v602, %v604
  %v612 = vsel %vm609, %v604, %v606
  %v613 = vsel %vm609, %v606, %v608
  %618 = vst [vmem:[#allocation3 + $0x40] sm:$0xf0] %v610
  %619 = vst [vmem:[#allocation3 + $0x48] sm:$0xf0] %v611
  %620 = vst [vmem:[#allocation3 + $0x50] sm:$0xf0] %v612
  %621 = vst [vmem:[#allocation3 + $0x58] sm:$0xf0] %v613
  %v622 = vld [vmem:[#allocation2 + $0x8] sm:$0xff]
  %v623 = vld [vmem:[#allocation2 + $0x10] sm:$0xff]
  %v624 = vld [vmem:[#allocation2 + $0x18] sm:$0xff]
  %v625 = vld [vmem:[#allocation2 + $0x20] sm:$0xff]
  %v626 = vld [vmem:[#allocation2 + $0x28] sm:$0xff]
  %s627 = scalar_lea.vmem %s3, 24
  %v628 = vld [vmem:[%s627] sm:$0xf]
  %v630 = vlaneseq
  %v631 = vshrl.u32 %v630, 7
  %v632 = vsub.s32 0, %v631
  %v633 = vrot.slane %v628, %v632
  %v634 = vlaneseq
  %v635 = vshrl.u32 %v634, 7
  %v636 = vsub.s32 1, %v635
  %v637 = vrot.slane %v628, %v636
  %v638 = vlaneseq
  %v639 = vshrl.u32 %v638, 7
  %v640 = vsub.s32 2, %v639
  %v641 = vrot.slane %v628, %v640
  %v642 = vlaneseq
  %v643 = vshrl.u32 %v642, 7
  %v644 = vsub.s32 3, %v643
  %v645 = vrot.slane %v628, %v644
  %646 = vrot.lane.b32.xlu0 %v633, 15
  %v647 = vpop.permute.xlu0 %646
  %648 = vrot.lane.b32.xlu0 %v637, 15
  %v649 = vpop.permute.xlu0 %648
  %650 = vrot.lane.b32.xlu0 %v641, 15
  %v651 = vpop.permute.xlu0 %650
  %652 = vrot.lane.b32.xlu0 %v645, 15
  %v653 = vpop.permute.xlu0 %652
  %vm654 = vcmask 121856
  %v655 = vsel %vm654, %v647, %v649
  %v656 = vsel %vm654, %v649, %v651
  %v657 = vsel %vm654, %v651, %v653
  %v663 = vmul.f32 %v622, %v647
  %v664 = vmul.f32 %v623, %v655
  %v665 = vmul.f32 %v624, %v656
  %v666 = vmul.f32 %v625, %v657
  %v667 = vmul.f32 %v626, %v653
  %v668 = vpack.c.bf16 %v663, %v663
  %v669 = vpack.c.bf16 %v664, %v664
  %v670 = vpack.c.bf16 %v665, %v665
  %v671 = vpack.c.bf16 %v666, %v666
  %v672 = vpack.c.bf16 %v667, %v667
  %678 = vrot.lane.b32.xlu0 %v668, 113
  %v679 = vpop.permute.xlu0 %678
  %680 = vrot.lane.b32.xlu0 %v669, 113
  %v681 = vpop.permute.xlu0 %680
  %682 = vrot.lane.b32.xlu0 %v670, 113
  %v683 = vpop.permute.xlu0 %682
  %684 = vrot.lane.b32.xlu0 %v671, 113
  %v685 = vpop.permute.xlu0 %684
  %686 = vrot.lane.b32.xlu0 %v672, 113
  %v687 = vpop.permute.xlu0 %686
  %vm688 = vcmask 924672
  %v689 = vsel %vm688, %v679, %v681
  %v690 = vsel %vm688, %v681, %v683
  %v691 = vsel %vm688, %v683, %v685
  %v692 = vsel %vm688, %v685, %v687
  %697 = vst [vmem:[#allocation3 + $0x60] sm:$0xf] %v689
  %698 = vst [vmem:[#allocation3 + $0x68] sm:$0xf] %v690
  %699 = vst [vmem:[#allocation3 + $0x70] sm:$0xf] %v691
  %700 = vst [vmem:[#allocation3 + $0x78] sm:$0xf] %v692
  %v701 = vld [vmem:[#allocation2 + $0x8] sm:$0xff]
  %v702 = vld [vmem:[#allocation2 + $0x10] sm:$0xff]
  %v703 = vld [vmem:[#allocation2 + $0x18] sm:$0xff]
  %v704 = vld [vmem:[#allocation2 + $0x20] sm:$0xff]
  %v705 = vld [vmem:[#allocation2 + $0x28] sm:$0xff]
  %s706 = scalar_lea.vmem %s3, 28
  %v707 = vld [vmem:[%s706] sm:$0xf]
  %v709 = vlaneseq
  %v710 = vshrl.u32 %v709, 7
  %v711 = vsub.s32 0, %v710
  %v712 = vrot.slane %v707, %v711
  %v713 = vlaneseq
  %v714 = vshrl.u32 %v713, 7
  %v715 = vsub.s32 1, %v714
  %v716 = vrot.slane %v707, %v715
  %v717 = vlaneseq
  %v718 = vshrl.u32 %v717, 7
  %v719 = vsub.s32 2, %v718
  %v720 = vrot.slane %v707, %v719
  %v721 = vlaneseq
  %v722 = vshrl.u32 %v721, 7
  %v723 = vsub.s32 3, %v722
  %v724 = vrot.slane %v707, %v723
  %725 = vrot.lane.b32.xlu0 %v712, 16
  %v726 = vpop.permute.xlu0 %725
  %727 = vrot.lane.b32.xlu0 %v716, 16
  %v728 = vpop.permute.xlu0 %727
  %729 = vrot.lane.b32.xlu0 %v720, 16
  %v730 = vpop.permute.xlu0 %729
  %731 = vrot.lane.b32.xlu0 %v724, 16
  %v732 = vpop.permute.xlu0 %731
  %vm733 = vcmask 130048
  %v734 = vsel %vm733, %v726, %v728
  %v735 = vsel %vm733, %v728, %v730
  %v736 = vsel %vm733, %v730, %v732
  %v742 = vmul.f32 %v701, %v726
  %v743 = vmul.f32 %v702, %v734
  %v744 = vmul.f32 %v703, %v735
  %v745 = vmul.f32 %v704, %v736
  %v746 = vmul.f32 %v705, %v732
  %v747 = vpack.c.bf16 %v742, %v742
  %v748 = vpack.c.bf16 %v743, %v743
  %v749 = vpack.c.bf16 %v744, %v744
  %v750 = vpack.c.bf16 %v745, %v745
  %v751 = vpack.c.bf16 %v746, %v746
  %v757 = vrot.slane %v747, 4
  %v758 = vrot.slane %v748, 4
  %v759 = vrot.slane %v749, 4
  %v760 = vrot.slane %v750, 4
  %v761 = vrot.slane %v751, 4
  %762 = vrot.lane.b32.xlu0 %v757, 112
  %v763 = vpop.permute.xlu0 %762
  %764 = vrot.lane.b32.xlu0 %v758, 112
  %v765 = vpop.permute.xlu0 %764
  %766 = vrot.lane.b32.xlu0 %v759, 112
  %v767 = vpop.permute.xlu0 %766
  %768 = vrot.lane.b32.xlu0 %v760, 112
  %v769 = vpop.permute.xlu0 %768
  %770 = vrot.lane.b32.xlu0 %v761, 112
  %v771 = vpop.permute.xlu0 %770
  %vm772 = vcmask 916480
  %v773 = vsel %vm772, %v763, %v765
  %v774 = vsel %vm772, %v765, %v767
  %v775 = vsel %vm772, %v767, %v769
  %v776 = vsel %vm772, %v769, %v771
  %781 = vst [vmem:[#allocation3 + $0x60] sm:$0xf0] %v773
  %782 = vst [vmem:[#allocation3 + $0x68] sm:$0xf0] %v774
  %783 = vst [vmem:[#allocation3 + $0x70] sm:$0xf0] %v775
  %784 = vst [vmem:[#allocation3 + $0x78] sm:$0xf0] %v776
  %v785 = vld [vmem:[#allocation2 + $0x8] sm:$0xff]
  %v786 = vld [vmem:[#allocation2 + $0x10] sm:$0xff]
  %v787 = vld [vmem:[#allocation2 + $0x18] sm:$0xff]
  %v788 = vld [vmem:[#allocation2 + $0x20] sm:$0xff]
  %v789 = vld [vmem:[#allocation2 + $0x28] sm:$0xff]
  %s790 = scalar_lea.vmem %s3, 32
  %v791 = vld [vmem:[%s790] sm:$0xf]
  %v793 = vlaneseq
  %v794 = vshrl.u32 %v793, 7
  %v795 = vsub.s32 0, %v794
  %v796 = vrot.slane %v791, %v795
  %v797 = vlaneseq
  %v798 = vshrl.u32 %v797, 7
  %v799 = vsub.s32 1, %v798
  %v800 = vrot.slane %v791, %v799
  %v801 = vlaneseq
  %v802 = vshrl.u32 %v801, 7
  %v803 = vsub.s32 2, %v802
  %v804 = vrot.slane %v791, %v803
  %v805 = vlaneseq
  %v806 = vshrl.u32 %v805, 7
  %v807 = vsub.s32 3, %v806
  %v808 = vrot.slane %v791, %v807
  %809 = vrot.lane.b32.xlu0 %v796, 17
  %v810 = vpop.permute.xlu0 %809
  %811 = vrot.lane.b32.xlu0 %v800, 17
  %v812 = vpop.permute.xlu0 %811
  %813 = vrot.lane.b32.xlu0 %v804, 17
  %v814 = vpop.permute.xlu0 %813
  %815 = vrot.lane.b32.xlu0 %v808, 17
  %v816 = vpop.permute.xlu0 %815
  %vm817 = vcmask 138240
  %v818 = vsel %vm817, %v810, %v812
  %v819 = vsel %vm817, %v812, %v814
  %v820 = vsel %vm817, %v814, %v816
  %v826 = vmul.f32 %v785, %v810
  %v827 = vmul.f32 %v786, %v818
  %v828 = vmul.f32 %v787, %v819
  %v829 = vmul.f32 %v788, %v820
  %v830 = vmul.f32 %v789, %v816
  %v831 = vpack.c.bf16 %v826, %v826
  %v832 = vpack.c.bf16 %v827, %v827
  %v833 = vpack.c.bf16 %v828, %v828
  %v834 = vpack.c.bf16 %v829, %v829
  %v835 = vpack.c.bf16 %v830, %v830
  %841 = vrot.lane.b32.xlu0 %v831, 111
  %v842 = vpop.permute.xlu0 %841
  %843 = vrot.lane.b32.xlu0 %v832, 111
  %v844 = vpop.permute.xlu0 %843
  %845 = vrot.lane.b32.xlu0 %v833, 111
  %v846 = vpop.permute.xlu0 %845
  %847 = vrot.lane.b32.xlu0 %v834, 111
  %v848 = vpop.permute.xlu0 %847
  %849 = vrot.lane.b32.xlu0 %v835, 111
  %v850 = vpop.permute.xlu0 %849
  %vm851 = vcmask 908288
  %v852 = vsel %vm851, %v842, %v844
  %v853 = vsel %vm851, %v844, %v846
  %v854 = vsel %vm851, %v846, %v848
  %v855 = vsel %vm851, %v848, %v850
  %860 = vst [vmem:[#allocation3 + $0x80] sm:$0xf] %v852
  %861 = vst [vmem:[#allocation3 + $0x88] sm:$0xf] %v853
  %862 = vst [vmem:[#allocation3 + $0x90] sm:$0xf] %v854
  %863 = vst [vmem:[#allocation3 + $0x98] sm:$0xf] %v855
  %864 = vst [vmem:[#allocation3 + $0x80] sm:$0xf0] 1065369472
  %865 = vst [vmem:[#allocation3 + $0x88] sm:$0xf0] 1065369472
  %866 = vst [vmem:[#allocation3 + $0x90] sm:$0xf0] 1065369472
  %867 = vst [vmem:[#allocation3 + $0x98] sm:$0xf0] 1065369472
  %v868 = vld [vmem:[%s4] sm:$0xf]
  %v869 = vld [vmem:[#allocation3] sm:$0xff]
  %v870 = vld [vmem:[#allocation3 + $0x8] sm:$0xff]
  %v871 = vld [vmem:[#allocation3 + $0x10] sm:$0xff]
  %v872 = vld [vmem:[#allocation3 + $0x18] sm:$0xff]
  %v873 = vld [vmem:[#allocation3 + $0x20] sm:$0xff]
  %v874 = vld [vmem:[#allocation3 + $0x28] sm:$0xff]
  %v875 = vld [vmem:[#allocation3 + $0x30] sm:$0xff]
  %v876 = vld [vmem:[#allocation3 + $0x38] sm:$0xff]
  %v877 = vld [vmem:[#allocation3 + $0x40] sm:$0xff]
  %v878 = vld [vmem:[#allocation3 + $0x48] sm:$0xff]
  %v879 = vld [vmem:[#allocation3 + $0x50] sm:$0xff]
  %v880 = vld [vmem:[#allocation3 + $0x58] sm:$0xff]
  %v881 = vld [vmem:[#allocation3 + $0x60] sm:$0xff]
  %v882 = vld [vmem:[#allocation3 + $0x68] sm:$0xff]
  %v883 = vld [vmem:[#allocation3 + $0x70] sm:$0xff]
  %v884 = vld [vmem:[#allocation3 + $0x78] sm:$0xff]
  %v885 = vld [vmem:[#allocation3 + $0x80] sm:$0xff]
  %v886 = vld [vmem:[#allocation3 + $0x88] sm:$0xff]
  %v887 = vld [vmem:[#allocation3 + $0x90] sm:$0xff]
  %v888 = vld [vmem:[#allocation3 + $0x98] sm:$0xff]
  %vm889 = vcmask 654336
  %v891 = vsel %vm889, %v868, 0
  %893 = vmatprep.subr.bf16.mxu0 %v870
  %894 = vmatpush1.bf16.msra.mxu0 %v869
  %895 = vmatprep.subr.bf16.mxu0 %v874
  %896 = vmatpush1.bf16.msra.mxu0 %v873
  %897 = vmatprep.subr.bf16.mxu0 %v878
  %898 = vmatpush1.bf16.msra.mxu0 %v877
  %899 = vmatprep.subr.bf16.mxu0 %v882
  %900 = vmatpush1.bf16.msra.mxu0 %v881
  %901 = vmatprep.subr.bf16.mxu0 %v886
  %902 = vmatpush1.bf16.msra.mxu0 %v885
  %903 = vmatprep.subr.bf16.mxu0 0
  %904 = vmatpush1.bf16.msra.mxu0 0
  %905 = vmatprep.subr.bf16.mxu0 0
  %906 = vmatpush1.bf16.msra.mxu0 0
  %907 = vmatprep.subr.bf16.mxu0 0
  %908 = vmatpush1.bf16.msra.mxu0 0
  %909 = vmatprep.subr.bf16.mxu0 0
  %910 = vmatpush1.bf16.msra.mxu0 0
  %911 = vmatprep.subr.bf16.mxu0 0
  %912 = vmatpush1.bf16.msra.mxu0 0
  %913 = vmatprep.subr.bf16.mxu0 0
  %914 = vmatpush1.bf16.msra.mxu0 0
  %915 = vmatprep.subr.bf16.mxu0 0
  %916 = vmatpush1.bf16.msra.mxu0 0
  %917 = vmatprep.subr.bf16.mxu0 0
  %918 = vmatpush1.bf16.msra.mxu0 0
  %919 = vmatprep.subr.bf16.mxu0 0
  %920 = vmatpush1.bf16.msra.mxu0 0
  %921 = vmatprep.subr.bf16.mxu0 0
  %922 = vmatpush1.bf16.msra.mxu0 0
  %923 = vmatprep.subr.bf16.mxu0 0
  %924 = vmatpush1.bf16.msra.mxu0 0
  %925 = vmatprep.mubr.bf16.mxu0 0
  %926 = vmatmul.mubr.bf16.gmra.mrb[0].mxu0 %v891
  %v927 = vpop.f32.mrb[0].mxu0
  %v928 = vadd.f32 0.0, %v927
  %v929 = vpop.f32.mrb[0].mxu0
  %v930 = vadd.f32 0.0, %v929
  %v931 = vpop.f32.mrb[0].mxu0
  %v932 = vpop.f32.mrb[0].mxu0
  %933 = vdwg.mxu0
  %934 = vmatprep.subr.bf16.mxu0 %v872
  %935 = vmatpush1.bf16.msra.mxu0 %v871
  %936 = vmatprep.subr.bf16.mxu0 %v876
  %937 = vmatpush1.bf16.msra.mxu0 %v875
  %938 = vmatprep.subr.bf16.mxu0 %v880
  %939 = vmatpush1.bf16.msra.mxu0 %v879
  %940 = vmatprep.subr.bf16.mxu0 %v884
  %941 = vmatpush1.bf16.msra.mxu0 %v883
  %942 = vmatprep.subr.bf16.mxu0 %v888
  %943 = vmatpush1.bf16.msra.mxu0 %v887
  %944 = vmatprep.subr.bf16.mxu0 0
  %945 = vmatpush1.bf16.msra.mxu0 0
  %946 = vmatprep.subr.bf16.mxu0 0
  %947 = vmatpush1.bf16.msra.mxu0 0
  %948 = vmatprep.subr.bf16.mxu0 0
  %949 = vmatpush1.bf16.msra.mxu0 0
  %950 = vmatprep.subr.bf16.mxu0 0
  %951 = vmatpush1.bf16.msra.mxu0 0
  %952 = vmatprep.subr.bf16.mxu0 0
  %953 = vmatpush1.bf16.msra.mxu0 0
  %954 = vmatprep.subr.bf16.mxu0 0
  %955 = vmatpush1.bf16.msra.mxu0 0
  %956 = vmatprep.subr.bf16.mxu0 0
  %957 = vmatpush1.bf16.msra.mxu0 0
  %958 = vmatprep.subr.bf16.mxu0 0
  %959 = vmatpush1.bf16.msra.mxu0 0
  %960 = vmatprep.subr.bf16.mxu0 0
  %961 = vmatpush1.bf16.msra.mxu0 0
  %962 = vmatprep.subr.bf16.mxu0 0
  %963 = vmatpush1.bf16.msra.mxu0 0
  %964 = vmatprep.subr.bf16.mxu0 0
  %965 = vmatpush1.bf16.msra.mxu0 0
  %966 = vmatprep.mubr.bf16.mxu0 0
  %967 = vmatmul.mubr.bf16.gmra.mrb[0].mxu0 %v891
  %v968 = vpop.f32.mrb[0].mxu0
  %v969 = vadd.f32 0.0, %v968
  %v970 = vpop.f32.mrb[0].mxu0
  %v971 = vadd.f32 0.0, %v970
  %v972 = vpop.f32.mrb[0].mxu0
  %v973 = vpop.f32.mrb[0].mxu0
  %974 = vdwg.mxu0
  %vm975 = vcmp.ge.f32.partialorder %v928, 0.0
  %vm976 = vcmp.ge.f32.partialorder %v930, 0.0
  %vm977 = vcmp.ge.f32.partialorder %v969, 0.0
  %vm978 = vcmp.ge.f32.partialorder %v971, 0.0
  %v979 = vmul.f32 %v928, 0.1
  %v980 = vmul.f32 %v930, 0.1
  %v981 = vmul.f32 %v969, 0.1
  %v982 = vmul.f32 %v971, 0.1
  %v983 = vsel %vm975, %v928, %v979
  %v984 = vsel %vm976, %v930, %v980
  %v985 = vsel %vm977, %v969, %v981
  %v986 = vsel %vm978, %v971, %v982
  %987 = vst [vmem:[#allocation2 + $0x8] sm:$0xff] %v983
  %988 = vst [vmem:[#allocation2 + $0x10] sm:$0xff] %v984
  %989 = vst [vmem:[#allocation2 + $0x18] sm:$0xff] %v985
  %990 = vst [vmem:[#allocation2 + $0x20] sm:$0xff] %v986
  %v991 = vld [vmem:[#allocation2] sm:$0xff]
  %v992 = vld [vmem:[#allocation2 + $0x8] sm:$0xff]
  %v993 = vld [vmem:[#allocation2 + $0x10] sm:$0xff]
  %v994 = vld [vmem:[#allocation2 + $0x18] sm:$0xff]
  %v995 = vld [vmem:[#allocation2 + $0x20] sm:$0xff]
  %v996 = vld [vmem:[%s3] sm:$0xf]
  %v998 = vlaneseq
  %v999 = vshrl.u32 %v998, 7
  %v1000 = vsub.s32 0, %v999
  %v1001 = vrot.slane %v996, %v1000
  %v1002 = vlaneseq
  %v1003 = vshrl.u32 %v1002, 7
  %v1004 = vsub.s32 1, %v1003
  %v1005 = vrot.slane %v996, %v1004
  %v1006 = vlaneseq
  %v1007 = vshrl.u32 %v1006, 7
  %v1008 = vsub.s32 2, %v1007
  %v1009 = vrot.slane %v996, %v1008
  %v1010 = vlaneseq
  %v1011 = vshrl.u32 %v1010, 7
  %v1012 = vsub.s32 3, %v1011
  %v1013 = vrot.slane %v996, %v1012
  %1014 = vrot.lane.b32.xlu0 %v1001, 111
  %v1015 = vpop.permute.xlu0 %1014
  %1016 = vrot.lane.b32.xlu0 %v1005, 111
  %v1017 = vpop.permute.xlu0 %1016
  %1018 = vrot.lane.b32.xlu0 %v1009, 111
  %v1019 = vpop.permute.xlu0 %1018
  %1020 = vrot.lane.b32.xlu0 %v1013, 111
  %v1021 = vpop.permute.xlu0 %1020
  %v1022 = vsel %vm232, %v1015, %v1017
  %v1023 = vsel %vm232, %v1017, %v1019
  %v1024 = vsel %vm232, %v1019, %v1021
  %v1030 = vmul.f32 %v991, %v1015
  %v1031 = vmul.f32 %v992, %v1022
  %v1032 = vmul.f32 %v993, %v1023
  %v1033 = vmul.f32 %v994, %v1024
  %v1034 = vmul.f32 %v995, %v1021
  %v1035 = vpack.c.bf16 %v1030, %v1030
  %v1036 = vpack.c.bf16 %v1031, %v1031
  %v1037 = vpack.c.bf16 %v1032, %v1032
  %v1038 = vpack.c.bf16 %v1033, %v1033
  %v1039 = vpack.c.bf16 %v1034, %v1034
  %1045 = vrot.lane.b32.xlu0 %v1035, 17
  %v1046 = vpop.permute.xlu0 %1045
  %1047 = vrot.lane.b32.xlu0 %v1036, 17
  %v1048 = vpop.permute.xlu0 %1047
  %1049 = vrot.lane.b32.xlu0 %v1037, 17
  %v1050 = vpop.permute.xlu0 %1049
  %1051 = vrot.lane.b32.xlu0 %v1038, 17
  %v1052 = vpop.permute.xlu0 %1051
  %1053 = vrot.lane.b32.xlu0 %v1039, 17
  %v1054 = vpop.permute.xlu0 %1053
  %v1055 = vsel %vm266, %v1046, %v1048
  %v1056 = vsel %vm266, %v1048, %v1050
  %v1057 = vsel %vm266, %v1050, %v1052
  %v1058 = vsel %vm266, %v1052, %v1054
  %1063 = vst [vmem:[#allocation3] sm:$0xf] %v1055
  %1064 = vst [vmem:[#allocation3 + $0x8] sm:$0xf] %v1056
  %1065 = vst [vmem:[#allocation3 + $0x10] sm:$0xf] %v1057
  %1066 = vst [vmem:[#allocation3 + $0x18] sm:$0xf] %v1058
  %v1067 = vld [vmem:[#allocation2] sm:$0xff]
  %v1068 = vld [vmem:[#allocation2 + $0x8] sm:$0xff]
  %v1069 = vld [vmem:[#allocation2 + $0x10] sm:$0xff]
  %v1070 = vld [vmem:[#allocation2 + $0x18] sm:$0xff]
  %v1071 = vld [vmem:[#allocation2 + $0x20] sm:$0xff]
  %v1072 = vld [vmem:[%s284] sm:$0xf]
  %v1074 = vlaneseq
  %v1075 = vshrl.u32 %v1074, 7
  %v1076 = vsub.s32 0, %v1075
  %v1077 = vrot.slane %v1072, %v1076
  %v1078 = vlaneseq
  %v1079 = vshrl.u32 %v1078, 7
  %v1080 = vsub.s32 1, %v1079
  %v1081 = vrot.slane %v1072, %v1080
  %v1082 = vlaneseq
  %v1083 = vshrl.u32 %v1082, 7
  %v1084 = vsub.s32 2, %v1083
  %v1085 = vrot.slane %v1072, %v1084
  %v1086 = vlaneseq
  %v1087 = vshrl.u32 %v1086, 7
  %v1088 = vsub.s32 3, %v1087
  %v1089 = vrot.slane %v1072, %v1088
  %1090 = vrot.lane.b32.xlu0 %v1077, 112
  %v1091 = vpop.permute.xlu0 %1090
  %1092 = vrot.lane.b32.xlu0 %v1081, 112
  %v1093 = vpop.permute.xlu0 %1092
  %1094 = vrot.lane.b32.xlu0 %v1085, 112
  %v1095 = vpop.permute.xlu0 %1094
  %1096 = vrot.lane.b32.xlu0 %v1089, 112
  %v1097 = vpop.permute.xlu0 %1096
  %v1098 = vsel %vm311, %v1091, %v1093
  %v1099 = vsel %vm311, %v1093, %v1095
  %v1100 = vsel %vm311, %v1095, %v1097
  %v1106 = vmul.f32 %v1067, %v1091
  %v1107 = vmul.f32 %v1068, %v1098
  %v1108 = vmul.f32 %v1069, %v1099
  %v1109 = vmul.f32 %v1070, %v1100
  %v1110 = vmul.f32 %v1071, %v1097
  %v1111 = vpack.c.bf16 %v1106, %v1106
  %v1112 = vpack.c.bf16 %v1107, %v1107
  %v1113 = vpack.c.bf16 %v1108, %v1108
  %v1114 = vpack.c.bf16 %v1109, %v1109
  %v1115 = vpack.c.bf16 %v1110, %v1110
  %v1121 = vrot.slane %v1111, 4
  %v1122 = vrot.slane %v1112, 4
  %v1123 = vrot.slane %v1113, 4
  %v1124 = vrot.slane %v1114, 4
  %v1125 = vrot.slane %v1115, 4
  %1126 = vrot.lane.b32.xlu0 %v1121, 16
  %v1127 = vpop.permute.xlu0 %1126
  %1128 = vrot.lane.b32.xlu0 %v1122, 16
  %v1129 = vpop.permute.xlu0 %1128
  %1130 = vrot.lane.b32.xlu0 %v1123, 16
  %v1131 = vpop.permute.xlu0 %1130
  %1132 = vrot.lane.b32.xlu0 %v1124, 16
  %v1133 = vpop.permute.xlu0 %1132
  %1134 = vrot.lane.b32.xlu0 %v1125, 16
  %v1135 = vpop.permute.xlu0 %1134
  %v1136 = vsel %vm350, %v1127, %v1129
  %v1137 = vsel %vm350, %v1129, %v1131
  %v1138 = vsel %vm350, %v1131, %v1133
  %v1139 = vsel %vm350, %v1133, %v1135
  %1144 = vst [vmem:[#allocation3] sm:$0xf0] %v1136
  %1145 = vst [vmem:[#allocation3 + $0x8] sm:$0xf0] %v1137
  %1146 = vst [vmem:[#allocation3 + $0x10] sm:$0xf0] %v1138
  %1147 = vst [vmem:[#allocation3 + $0x18] sm:$0xf0] %v1139
  %v1148 = vld [vmem:[#allocation2] sm:$0xff]
  %v1149 = vld [vmem:[#allocation2 + $0x8] sm:$0xff]
  %v1150 = vld [vmem:[#allocation2 + $0x10] sm:$0xff]
  %v1151 = vld [vmem:[#allocation2 + $0x18] sm:$0xff]
  %v1152 = vld [vmem:[#allocation2 + $0x20] sm:$0xff]
  %v1153 = vld [vmem:[%s368] sm:$0xf]
  %v1155 = vlaneseq
  %v1156 = vshrl.u32 %v1155, 7
  %v1157 = vsub.s32 0, %v1156
  %v1158 = vrot.slane %v1153, %v1157
  %v1159 = vlaneseq
  %v1160 = vshrl.u32 %v1159, 7
  %v1161 = vsub.s32 1, %v1160
  %v1162 = vrot.slane %v1153, %v1161
  %v1163 = vlaneseq
  %v1164 = vshrl.u32 %v1163, 7
  %v1165 = vsub.s32 2, %v1164
  %v1166 = vrot.slane %v1153, %v1165
  %v1167 = vlaneseq
  %v1168 = vshrl.u32 %v1167, 7
  %v1169 = vsub.s32 3, %v1168
  %v1170 = vrot.slane %v1153, %v1169
  %1171 = vrot.lane.b32.xlu0 %v1158, 113
  %v1172 = vpop.permute.xlu0 %1171
  %1173 = vrot.lane.b32.xlu0 %v1162, 113
  %v1174 = vpop.permute.xlu0 %1173
  %1175 = vrot.lane.b32.xlu0 %v1166, 113
  %v1176 = vpop.permute.xlu0 %1175
  %1177 = vrot.lane.b32.xlu0 %v1170, 113
  %v1178 = vpop.permute.xlu0 %1177
  %v1179 = vsel %vm395, %v1172, %v1174
  %v1180 = vsel %vm395, %v1174, %v1176
  %v1181 = vsel %vm395, %v1176, %v1178
  %v1187 = vmul.f32 %v1148, %v1172
  %v1188 = vmul.f32 %v1149, %v1179
  %v1189 = vmul.f32 %v1150, %v1180
  %v1190 = vmul.f32 %v1151, %v1181
  %v1191 = vmul.f32 %v1152, %v1178
  %v1192 = vpack.c.bf16 %v1187, %v1187
  %v1193 = vpack.c.bf16 %v1188, %v1188
  %v1194 = vpack.c.bf16 %v1189, %v1189
  %v1195 = vpack.c.bf16 %v1190, %v1190
  %v1196 = vpack.c.bf16 %v1191, %v1191
  %1202 = vrot.lane.b32.xlu0 %v1192, 15
  %v1203 = vpop.permute.xlu0 %1202
  %1204 = vrot.lane.b32.xlu0 %v1193, 15
  %v1205 = vpop.permute.xlu0 %1204
  %1206 = vrot.lane.b32.xlu0 %v1194, 15
  %v1207 = vpop.permute.xlu0 %1206
  %1208 = vrot.lane.b32.xlu0 %v1195, 15
  %v1209 = vpop.permute.xlu0 %1208
  %1210 = vrot.lane.b32.xlu0 %v1196, 15
  %v1211 = vpop.permute.xlu0 %1210
  %v1212 = vsel %vm429, %v1203, %v1205
  %v1213 = vsel %vm429, %v1205, %v1207
  %v1214 = vsel %vm429, %v1207, %v1209
  %v1215 = vsel %vm429, %v1209, %v1211
  %1220 = vst [vmem:[#allocation3 + $0x20] sm:$0xf] %v1212
  %1221 = vst [vmem:[#allocation3 + $0x28] sm:$0xf] %v1213
  %1222 = vst [vmem:[#allocation3 + $0x30] sm:$0xf] %v1214
  %1223 = vst [vmem:[#allocation3 + $0x38] sm:$0xf] %v1215
  %v1224 = vld [vmem:[#allocation2] sm:$0xff]
  %v1225 = vld [vmem:[#allocation2 + $0x8] sm:$0xff]
  %v1226 = vld [vmem:[#allocation2 + $0x10] sm:$0xff]
  %v1227 = vld [vmem:[#allocation2 + $0x18] sm:$0xff]
  %v1228 = vld [vmem:[#allocation2 + $0x20] sm:$0xff]
  %v1229 = vld [vmem:[%s447] sm:$0xf]
  %v1231 = vlaneseq
  %v1232 = vshrl.u32 %v1231, 7
  %v1233 = vsub.s32 0, %v1232
  %v1234 = vrot.slane %v1229, %v1233
  %v1235 = vlaneseq
  %v1236 = vshrl.u32 %v1235, 7
  %v1237 = vsub.s32 1, %v1236
  %v1238 = vrot.slane %v1229, %v1237
  %v1239 = vlaneseq
  %v1240 = vshrl.u32 %v1239, 7
  %v1241 = vsub.s32 2, %v1240
  %v1242 = vrot.slane %v1229, %v1241
  %v1243 = vlaneseq
  %v1244 = vshrl.u32 %v1243, 7
  %v1245 = vsub.s32 3, %v1244
  %v1246 = vrot.slane %v1229, %v1245
  %1247 = vrot.lane.b32.xlu0 %v1234, 127
  %v1248 = vpop.permute.xlu0 %1247
  %1249 = vrot.lane.b32.xlu0 %v1238, 127
  %v1250 = vpop.permute.xlu0 %1249
  %1251 = vrot.lane.b32.xlu0 %v1242, 127
  %v1252 = vpop.permute.xlu0 %1251
  %1253 = vrot.lane.b32.xlu0 %v1246, 127
  %v1254 = vpop.permute.xlu0 %1253
  %v1255 = vsel %vm474, %v1248, %v1250
  %v1256 = vsel %vm474, %v1250, %v1252
  %v1257 = vsel %vm474, %v1252, %v1254
  %v1263 = vmul.f32 %v1224, %v1248
  %v1264 = vmul.f32 %v1225, %v1255
  %v1265 = vmul.f32 %v1226, %v1256
  %v1266 = vmul.f32 %v1227, %v1257
  %v1267 = vmul.f32 %v1228, %v1254
  %v1268 = vpack.c.bf16 %v1263, %v1263
  %v1269 = vpack.c.bf16 %v1264, %v1264
  %v1270 = vpack.c.bf16 %v1265, %v1265
  %v1271 = vpack.c.bf16 %v1266, %v1266
  %v1272 = vpack.c.bf16 %v1267, %v1267
  %v1278 = vrot.slane %v1268, 4
  %v1279 = vrot.slane %v1269, 4
  %v1280 = vrot.slane %v1270, 4
  %v1281 = vrot.slane %v1271, 4
  %v1282 = vrot.slane %v1272, 4
  %1283 = vrot.lane.b32.xlu0 %v1278, 1
  %v1284 = vpop.permute.xlu0 %1283
  %1285 = vrot.lane.b32.xlu0 %v1279, 1
  %v1286 = vpop.permute.xlu0 %1285
  %1287 = vrot.lane.b32.xlu0 %v1280, 1
  %v1288 = vpop.permute.xlu0 %1287
  %1289 = vrot.lane.b32.xlu0 %v1281, 1
  %v1290 = vpop.permute.xlu0 %1289
  %1291 = vrot.lane.b32.xlu0 %v1282, 1
  %v1292 = vpop.permute.xlu0 %1291
  %v1293 = vsel %vm513, %v1284, %v1286
  %v1294 = vsel %vm513, %v1286, %v1288
  %v1295 = vsel %vm513, %v1288, %v1290
  %v1296 = vsel %vm513, %v1290, %v1292
  %1301 = vst [vmem:[#allocation3 + $0x20] sm:$0xf0] %v1293
  %1302 = vst [vmem:[#allocation3 + $0x28] sm:$0xf0] %v1294
  %1303 = vst [vmem:[#allocation3 + $0x30] sm:$0xf0] %v1295
  %1304 = vst [vmem:[#allocation3 + $0x38] sm:$0xf0] %v1296
  %v1305 = vld [vmem:[#allocation2 + $0x8] sm:$0xff]
  %v1306 = vld [vmem:[#allocation2 + $0x10] sm:$0xff]
  %v1307 = vld [vmem:[#allocation2 + $0x18] sm:$0xff]
  %v1308 = vld [vmem:[#allocation2 + $0x20] sm:$0xff]
  %v1309 = vpack.c.bf16 %v1305, %v1305
  %v1310 = vpack.c.bf16 %v1306, %v1306
  %v1311 = vpack.c.bf16 %v1307, %v1307
  %v1312 = vpack.c.bf16 %v1308, %v1308
  %1313 = vst [vmem:[#allocation3 + $0x40] sm:$0xf] %v1309
  %1314 = vst [vmem:[#allocation3 + $0x48] sm:$0xf] %v1310
  %1315 = vst [vmem:[#allocation3 + $0x50] sm:$0xf] %v1311
  %1316 = vst [vmem:[#allocation3 + $0x58] sm:$0xf] %v1312
  %v1317 = vld [vmem:[#allocation2 + $0x8] sm:$0xff]
  %v1318 = vld [vmem:[#allocation2 + $0x10] sm:$0xff]
  %v1319 = vld [vmem:[#allocation2 + $0x18] sm:$0xff]
  %v1320 = vld [vmem:[#allocation2 + $0x20] sm:$0xff]
  %v1321 = vld [vmem:[#allocation2 + $0x28] sm:$0xff]
  %v1322 = vld [vmem:[%s543] sm:$0xf]
  %v1324 = vlaneseq
  %v1325 = vshrl.u32 %v1324, 7
  %v1326 = vsub.s32 0, %v1325
  %v1327 = vrot.slane %v1322, %v1326
  %v1328 = vlaneseq
  %v1329 = vshrl.u32 %v1328, 7
  %v1330 = vsub.s32 1, %v1329
  %v1331 = vrot.slane %v1322, %v1330
  %v1332 = vlaneseq
  %v1333 = vshrl.u32 %v1332, 7
  %v1334 = vsub.s32 2, %v1333
  %v1335 = vrot.slane %v1322, %v1334
  %v1336 = vlaneseq
  %v1337 = vshrl.u32 %v1336, 7
  %v1338 = vsub.s32 3, %v1337
  %v1339 = vrot.slane %v1322, %v1338
  %1340 = vrot.lane.b32.xlu0 %v1327, 1
  %v1341 = vpop.permute.xlu0 %1340
  %1342 = vrot.lane.b32.xlu0 %v1331, 1
  %v1343 = vpop.permute.xlu0 %1342
  %1344 = vrot.lane.b32.xlu0 %v1335, 1
  %v1345 = vpop.permute.xlu0 %1344
  %1346 = vrot.lane.b32.xlu0 %v1339, 1
  %v1347 = vpop.permute.xlu0 %1346
  %v1348 = vsel %vm570, %v1341, %v1343
  %v1349 = vsel %vm570, %v1343, %v1345
  %v1350 = vsel %vm570, %v1345, %v1347
  %v1356 = vmul.f32 %v1317, %v1341
  %v1357 = vmul.f32 %v1318, %v1348
  %v1358 = vmul.f32 %v1319, %v1349
  %v1359 = vmul.f32 %v1320, %v1350
  %v1360 = vmul.f32 %v1321, %v1347
  %v1361 = vpack.c.bf16 %v1356, %v1356
  %v1362 = vpack.c.bf16 %v1357, %v1357
  %v1363 = vpack.c.bf16 %v1358, %v1358
  %v1364 = vpack.c.bf16 %v1359, %v1359
  %v1365 = vpack.c.bf16 %v1360, %v1360
  %v1371 = vrot.slane %v1361, 4
  %v1372 = vrot.slane %v1362, 4
  %v1373 = vrot.slane %v1363, 4
  %v1374 = vrot.slane %v1364, 4
  %v1375 = vrot.slane %v1365, 4
  %1376 = vrot.lane.b32.xlu0 %v1371, 127
  %v1377 = vpop.permute.xlu0 %1376
  %1378 = vrot.lane.b32.xlu0 %v1372, 127
  %v1379 = vpop.permute.xlu0 %1378
  %1380 = vrot.lane.b32.xlu0 %v1373, 127
  %v1381 = vpop.permute.xlu0 %1380
  %1382 = vrot.lane.b32.xlu0 %v1374, 127
  %v1383 = vpop.permute.xlu0 %1382
  %1384 = vrot.lane.b32.xlu0 %v1375, 127
  %v1385 = vpop.permute.xlu0 %1384
  %v1386 = vsel %vm609, %v1377, %v1379
  %v1387 = vsel %vm609, %v1379, %v1381
  %v1388 = vsel %vm609, %v1381, %v1383
  %v1389 = vsel %vm609, %v1383, %v1385
  %1394 = vst [vmem:[#allocation3 + $0x40] sm:$0xf0] %v1386
  %1395 = vst [vmem:[#allocation3 + $0x48] sm:$0xf0] %v1387
  %1396 = vst [vmem:[#allocation3 + $0x50] sm:$0xf0] %v1388
  %1397 = vst [vmem:[#allocation3 + $0x58] sm:$0xf0] %v1389
  %v1398 = vld [vmem:[#allocation2 + $0x8] sm:$0xff]
  %v1399 = vld [vmem:[#allocation2 + $0x10] sm:$0xff]
  %v1400 = vld [vmem:[#allocation2 + $0x18] sm:$0xff]
  %v1401 = vld [vmem:[#allocation2 + $0x20] sm:$0xff]
  %v1402 = vld [vmem:[#allocation2 + $0x28] sm:$0xff]
  %v1403 = vld [vmem:[%s627] sm:$0xf]
  %v1405 = vlaneseq
  %v1406 = vshrl.u32 %v1405, 7
  %v1407 = vsub.s32 0, %v1406
  %v1408 = vrot.slane %v1403, %v1407
  %v1409 = vlaneseq
  %v1410 = vshrl.u32 %v1409, 7
  %v1411 = vsub.s32 1, %v1410
  %v1412 = vrot.slane %v1403, %v1411
  %v1413 = vlaneseq
  %v1414 = vshrl.u32 %v1413, 7
  %v1415 = vsub.s32 2, %v1414
  %v1416 = vrot.slane %v1403, %v1415
  %v1417 = vlaneseq
  %v1418 = vshrl.u32 %v1417, 7
  %v1419 = vsub.s32 3, %v1418
  %v1420 = vrot.slane %v1403, %v1419
  %1421 = vrot.lane.b32.xlu0 %v1408, 15
  %v1422 = vpop.permute.xlu0 %1421
  %1423 = vrot.lane.b32.xlu0 %v1412, 15
  %v1424 = vpop.permute.xlu0 %1423
  %1425 = vrot.lane.b32.xlu0 %v1416, 15
  %v1426 = vpop.permute.xlu0 %1425
  %1427 = vrot.lane.b32.xlu0 %v1420, 15
  %v1428 = vpop.permute.xlu0 %1427
  %v1429 = vsel %vm654, %v1422, %v1424
  %v1430 = vsel %vm654, %v1424, %v1426
  %v1431 = vsel %vm654, %v1426, %v1428
  %v1437 = vmul.f32 %v1398, %v1422
  %v1438 = vmul.f32 %v1399, %v1429
  %v1439 = vmul.f32 %v1400, %v1430
  %v1440 = vmul.f32 %v1401, %v1431
  %v1441 = vmul.f32 %v1402, %v1428
  %v1442 = vpack.c.bf16 %v1437, %v1437
  %v1443 = vpack.c.bf16 %v1438, %v1438
  %v1444 = vpack.c.bf16 %v1439, %v1439
  %v1445 = vpack.c.bf16 %v1440, %v1440
  %v1446 = vpack.c.bf16 %v1441, %v1441
  %1452 = vrot.lane.b32.xlu0 %v1442, 113
  %v1453 = vpop.permute.xlu0 %1452
  %1454 = vrot.lane.b32.xlu0 %v1443, 113
  %v1455 = vpop.permute.xlu0 %1454
  %1456 = vrot.lane.b32.xlu0 %v1444, 113
  %v1457 = vpop.permute.xlu0 %1456
  %1458 = vrot.lane.b32.xlu0 %v1445, 113
  %v1459 = vpop.permute.xlu0 %1458
  %1460 = vrot.lane.b32.xlu0 %v1446, 113
  %v1461 = vpop.permute.xlu0 %1460
  %v1462 = vsel %vm688, %v1453, %v1455
  %v1463 = vsel %vm688, %v1455, %v1457
  %v1464 = vsel %vm688, %v1457, %v1459
  %v1465 = vsel %vm688, %v1459, %v1461
  %1470 = vst [vmem:[#allocation3 + $0x60] sm:$0xf] %v1462
  %1471 = vst [vmem:[#allocation3 + $0x68] sm:$0xf] %v1463
  %1472 = vst [vmem:[#allocation3 + $0x70] sm:$0xf] %v1464
  %1473 = vst [vmem:[#allocation3 + $0x78] sm:$0xf] %v1465
  %v1474 = vld [vmem:[#allocation2 + $0x8] sm:$0xff]
  %v1475 = vld [vmem:[#allocation2 + $0x10] sm:$0xff]
  %v1476 = vld [vmem:[#allocation2 + $0x18] sm:$0xff]
  %v1477 = vld [vmem:[#allocation2 + $0x20] sm:$0xff]
  %v1478 = vld [vmem:[#allocation2 + $0x28] sm:$0xff]
  %v1479 = vld [vmem:[%s706] sm:$0xf]
  %v1481 = vlaneseq
  %v1482 = vshrl.u32 %v1481, 7
  %v1483 = vsub.s32 0, %v1482
  %v1484 = vrot.slane %v1479, %v1483
  %v1485 = vlaneseq
  %v1486 = vshrl.u32 %v1485, 7
  %v1487 = vsub.s32 1, %v1486
  %v1488 = vrot.slane %v1479, %v1487
  %v1489 = vlaneseq
  %v1490 = vshrl.u32 %v1489, 7
  %v1491 = vsub.s32 2, %v1490
  %v1492 = vrot.slane %v1479, %v1491
  %v1493 = vlaneseq
  %v1494 = vshrl.u32 %v1493, 7
  %v1495 = vsub.s32 3, %v1494
  %v1496 = vrot.slane %v1479, %v1495
  %1497 = vrot.lane.b32.xlu0 %v1484, 16
  %v1498 = vpop.permute.xlu0 %1497
  %1499 = vrot.lane.b32.xlu0 %v1488, 16
  %v1500 = vpop.permute.xlu0 %1499
  %1501 = vrot.lane.b32.xlu0 %v1492, 16
  %v1502 = vpop.permute.xlu0 %1501
  %1503 = vrot.lane.b32.xlu0 %v1496, 16
  %v1504 = vpop.permute.xlu0 %1503
  %v1505 = vsel %vm733, %v1498, %v1500
  %v1506 = vsel %vm733, %v1500, %v1502
  %v1507 = vsel %vm733, %v1502, %v1504
  %v1513 = vmul.f32 %v1474, %v1498
  %v1514 = vmul.f32 %v1475, %v1505
  %v1515 = vmul.f32 %v1476, %v1506
  %v1516 = vmul.f32 %v1477, %v1507
  %v1517 = vmul.f32 %v1478, %v1504
  %v1518 = vpack.c.bf16 %v1513, %v1513
  %v1519 = vpack.c.bf16 %v1514, %v1514
  %v1520 = vpack.c.bf16 %v1515, %v1515
  %v1521 = vpack.c.bf16 %v1516, %v1516
  %v1522 = vpack.c.bf16 %v1517, %v1517
  %v1528 = vrot.slane %v1518, 4
  %v1529 = vrot.slane %v1519, 4
  %v1530 = vrot.slane %v1520, 4
  %v1531 = vrot.slane %v1521, 4
  %v1532 = vrot.slane %v1522, 4
  %1533 = vrot.lane.b32.xlu0 %v1528, 112
  %v1534 = vpop.permute.xlu0 %1533
  %1535 = vrot.lane.b32.xlu0 %v1529, 112
  %v1536 = vpop.permute.xlu0 %1535
  %1537 = vrot.lane.b32.xlu0 %v1530, 112
  %v1538 = vpop.permute.xlu0 %1537
  %1539 = vrot.lane.b32.xlu0 %v1531, 112
  %v1540 = vpop.permute.xlu0 %1539
  %1541 = vrot.lane.b32.xlu0 %v1532, 112
  %v1542 = vpop.permute.xlu0 %1541
  %v1543 = vsel %vm772, %v1534, %v1536
  %v1544 = vsel %vm772, %v1536, %v1538
  %v1545 = vsel %vm772, %v1538, %v1540
  %v1546 = vsel %vm772, %v1540, %v1542
  %1551 = vst [vmem:[#allocation3 + $0x60] sm:$0xf0] %v1543
  %1552 = vst [vmem:[#allocation3 + $0x68] sm:$0xf0] %v1544
  %1553 = vst [vmem:[#allocation3 + $0x70] sm:$0xf0] %v1545
  %1554 = vst [vmem:[#allocation3 + $0x78] sm:$0xf0] %v1546
  %v1555 = vld [vmem:[#allocation2 + $0x8] sm:$0xff]
  %v1556 = vld [vmem:[#allocation2 + $0x10] sm:$0xff]
  %v1557 = vld [vmem:[#allocation2 + $0x18] sm:$0xff]
  %v1558 = vld [vmem:[#allocation2 + $0x20] sm:$0xff]
  %v1559 = vld [vmem:[#allocation2 + $0x28] sm:$0xff]
  %v1560 = vld [vmem:[%s790] sm:$0xf]
  %v1562 = vlaneseq
  %v1563 = vshrl.u32 %v1562, 7
  %v1564 = vsub.s32 0, %v1563
  %v1565 = vrot.slane %v1560, %v1564
  %v1566 = vlaneseq
  %v1567 = vshrl.u32 %v1566, 7
  %v1568 = vsub.s32 1, %v1567
  %v1569 = vrot.slane %v1560, %v1568
  %v1570 = vlaneseq
  %v1571 = vshrl.u32 %v1570, 7
  %v1572 = vsub.s32 2, %v1571
  %v1573 = vrot.slane %v1560, %v1572
  %v1574 = vlaneseq
  %v1575 = vshrl.u32 %v1574, 7
  %v1576 = vsub.s32 3, %v1575
  %v1577 = vrot.slane %v1560, %v1576
  %1578 = vrot.lane.b32.xlu0 %v1565, 17
  %v1579 = vpop.permute.xlu0 %1578
  %1580 = vrot.lane.b32.xlu0 %v1569, 17
  %v1581 = vpop.permute.xlu0 %1580
  %1582 = vrot.lane.b32.xlu0 %v1573, 17
  %v1583 = vpop.permute.xlu0 %1582
  %1584 = vrot.lane.b32.xlu0 %v1577, 17
  %v1585 = vpop.permute.xlu0 %1584
  %v1586 = vsel %vm817, %v1579, %v1581
  %v1587 = vsel %vm817, %v1581, %v1583
  %v1588 = vsel %vm817, %v1583, %v1585
  %v1594 = vmul.f32 %v1555, %v1579
  %v1595 = vmul.f32 %v1556, %v1586
  %v1596 = vmul.f32 %v1557, %v1587
  %v1597 = vmul.f32 %v1558, %v1588
  %v1598 = vmul.f32 %v1559, %v1585
  %v1599 = vpack.c.bf16 %v1594, %v1594
  %v1600 = vpack.c.bf16 %v1595, %v1595
  %v1601 = vpack.c.bf16 %v1596, %v1596
  %v1602 = vpack.c.bf16 %v1597, %v1597
  %v1603 = vpack.c.bf16 %v1598, %v1598
  %1609 = vrot.lane.b32.xlu0 %v1599, 111
  %v1610 = vpop.permute.xlu0 %1609
  %1611 = vrot.lane.b32.xlu0 %v1600, 111
  %v1612 = vpop.permute.xlu0 %1611
  %1613 = vrot.lane.b32.xlu0 %v1601, 111
  %v1614 = vpop.permute.xlu0 %1613
  %1615 = vrot.lane.b32.xlu0 %v1602, 111
  %v1616 = vpop.permute.xlu0 %1615
  %1617 = vrot.lane.b32.xlu0 %v1603, 111
  %v1618 = vpop.permute.xlu0 %1617
  %v1619 = vsel %vm851, %v1610, %v1612
  %v1620 = vsel %vm851, %v1612, %v1614
  %v1621 = vsel %vm851, %v1614, %v1616
  %v1622 = vsel %vm851, %v1616, %v1618
  %1627 = vst [vmem:[#allocation3 + $0x80] sm:$0xf] %v1619
  %1628 = vst [vmem:[#allocation3 + $0x88] sm:$0xf] %v1620
  %1629 = vst [vmem:[#allocation3 + $0x90] sm:$0xf] %v1621
  %1630 = vst [vmem:[#allocation3 + $0x98] sm:$0xf] %v1622
  %1631 = vst [vmem:[#allocation3 + $0x80] sm:$0xf0] 1065369472
  %1632 = vst [vmem:[#allocation3 + $0x88] sm:$0xf0] 1065369472
  %1633 = vst [vmem:[#allocation3 + $0x90] sm:$0xf0] 1065369472
  %1634 = vst [vmem:[#allocation3 + $0x98] sm:$0xf0] 1065369472
  %v1635 = vld [vmem:[%s5] sm:$0x3]
  %v1636 = vld [vmem:[#allocation3] sm:$0xff]
  %v1637 = vld [vmem:[#allocation3 + $0x8] sm:$0xff]
  %v1638 = vld [vmem:[#allocation3 + $0x10] sm:$0xff]
  %v1639 = vld [vmem:[#allocation3 + $0x18] sm:$0xff]
  %v1640 = vld [vmem:[#allocation3 + $0x20] sm:$0xff]
  %v1641 = vld [vmem:[#allocation3 + $0x28] sm:$0xff]
  %v1642 = vld [vmem:[#allocation3 + $0x30] sm:$0xff]
  %v1643 = vld [vmem:[#allocation3 + $0x38] sm:$0xff]
  %v1644 = vld [vmem:[#allocation3 + $0x40] sm:$0xff]
  %v1645 = vld [vmem:[#allocation3 + $0x48] sm:$0xff]
  %v1646 = vld [vmem:[#allocation3 + $0x50] sm:$0xff]
  %v1647 = vld [vmem:[#allocation3 + $0x58] sm:$0xff]
  %v1648 = vld [vmem:[#allocation3 + $0x60] sm:$0xff]
  %v1649 = vld [vmem:[#allocation3 + $0x68] sm:$0xff]
  %v1650 = vld [vmem:[#allocation3 + $0x70] sm:$0xff]
  %v1651 = vld [vmem:[#allocation3 + $0x78] sm:$0xff]
  %v1652 = vld [vmem:[#allocation3 + $0x80] sm:$0xff]
  %v1653 = vld [vmem:[#allocation3 + $0x88] sm:$0xff]
  %v1654 = vld [vmem:[#allocation3 + $0x90] sm:$0xff]
  %v1655 = vld [vmem:[#allocation3 + $0x98] sm:$0xff]
  %v1657 = vsel %vm889, %v1635, 0
  %1659 = vmatprep.subr.bf16.mxu0 %v1637
  %1660 = vmatpush1.bf16.msra.mxu0 %v1636
  %1661 = vmatprep.subr.bf16.mxu0 %v1641
  %1662 = vmatpush1.bf16.msra.mxu0 %v1640
  %1663 = vmatprep.subr.bf16.mxu0 %v1645
  %1664 = vmatpush1.bf16.msra.mxu0 %v1644
  %1665 = vmatprep.subr.bf16.mxu0 %v1649
  %1666 = vmatpush1.bf16.msra.mxu0 %v1648
  %1667 = vmatprep.subr.bf16.mxu0 %v1653
  %1668 = vmatpush1.bf16.msra.mxu0 %v1652
  %1669 = vmatprep.subr.bf16.mxu0 0
  %1670 = vmatpush1.bf16.msra.mxu0 0
  %1671 = vmatprep.subr.bf16.mxu0 0
  %1672 = vmatpush1.bf16.msra.mxu0 0
  %1673 = vmatprep.subr.bf16.mxu0 0
  %1674 = vmatpush1.bf16.msra.mxu0 0
  %1675 = vmatprep.subr.bf16.mxu0 0
  %1676 = vmatpush1.bf16.msra.mxu0 0
  %1677 = vmatprep.subr.bf16.mxu0 0
  %1678 = vmatpush1.bf16.msra.mxu0 0
  %1679 = vmatprep.subr.bf16.mxu0 0
  %1680 = vmatpush1.bf16.msra.mxu0 0
  %1681 = vmatprep.subr.bf16.mxu0 0
  %1682 = vmatpush1.bf16.msra.mxu0 0
  %1683 = vmatprep.subr.bf16.mxu0 0
  %1684 = vmatpush1.bf16.msra.mxu0 0
  %1685 = vmatprep.subr.bf16.mxu0 0
  %1686 = vmatpush1.bf16.msra.mxu0 0
  %1687 = vmatprep.subr.bf16.mxu0 0
  %1688 = vmatpush1.bf16.msra.mxu0 0
  %1689 = vmatprep.subr.bf16.mxu0 0
  %1690 = vmatpush1.bf16.msra.mxu0 0
  %1691 = vmatprep.mubr.bf16.mxu0 0
  %1692 = vmatmul.mubr.bf16.gmra.mrb[0].mxu0 %v1657
  %v1693 = vpop.f32.mrb[0].mxu0
  %v1694 = vadd.f32 0.0, %v1693
  %v1695 = vpop.f32.mrb[0].mxu0
  %v1696 = vadd.f32 0.0, %v1695
  %v1697 = vpop.f32.mrb[0].mxu0
  %v1698 = vpop.f32.mrb[0].mxu0
  %1699 = vdwg.mxu0
  %1700 = vmatprep.subr.bf16.mxu0 %v1639
  %1701 = vmatpush1.bf16.msra.mxu0 %v1638
  %1702 = vmatprep.subr.bf16.mxu0 %v1643
  %1703 = vmatpush1.bf16.msra.mxu0 %v1642
  %1704 = vmatprep.subr.bf16.mxu0 %v1647
  %1705 = vmatpush1.bf16.msra.mxu0 %v1646
  %1706 = vmatprep.subr.bf16.mxu0 %v1651
  %1707 = vmatpush1.bf16.msra.mxu0 %v1650
  %1708 = vmatprep.subr.bf16.mxu0 %v1655
  %1709 = vmatpush1.bf16.msra.mxu0 %v1654
  %1710 = vmatprep.subr.bf16.mxu0 0
  %1711 = vmatpush1.bf16.msra.mxu0 0
  %1712 = vmatprep.subr.bf16.mxu0 0
  %1713 = vmatpush1.bf16.msra.mxu0 0
  %1714 = vmatprep.subr.bf16.mxu0 0
  %1715 = vmatpush1.bf16.msra.mxu0 0
  %1716 = vmatprep.subr.bf16.mxu0 0
  %1717 = vmatpush1.bf16.msra.mxu0 0
  %1718 = vmatprep.subr.bf16.mxu0 0
  %1719 = vmatpush1.bf16.msra.mxu0 0
  %1720 = vmatprep.subr.bf16.mxu0 0
  %1721 = vmatpush1.bf16.msra.mxu0 0
  %1722 = vmatprep.subr.bf16.mxu0 0
  %1723 = vmatpush1.bf16.msra.mxu0 0
  %1724 = vmatprep.subr.bf16.mxu0 0
  %1725 = vmatpush1.bf16.msra.mxu0 0
  %1726 = vmatprep.subr.bf16.mxu0 0
  %1727 = vmatpush1.bf16.msra.mxu0 0
  %1728 = vmatprep.subr.bf16.mxu0 0
  %1729 = vmatpush1.bf16.msra.mxu0 0
  %1730 = vmatprep.subr.bf16.mxu0 0
  %1731 = vmatpush1.bf16.msra.mxu0 0
  %1732 = vmatprep.mubr.bf16.mxu0 0
  %1733 = vmatmul.mubr.bf16.gmra.mrb[0].mxu0 %v1657
  %v1734 = vpop.f32.mrb[0].mxu0
  %v1735 = vadd.f32 0.0, %v1734
  %v1736 = vpop.f32.mrb[0].mxu0
  %v1737 = vadd.f32 0.0, %v1736
  %v1738 = vpop.f32.mrb[0].mxu0
  %v1739 = vpop.f32.mrb[0].mxu0
  %1740 = vdwg.mxu0
  %vm1741 = vcmp.ge.f32.partialorder %v1694, 0.0
  %vm1742 = vcmp.ge.f32.partialorder %v1696, 0.0
  %vm1743 = vcmp.ge.f32.partialorder %v1735, 0.0
  %vm1744 = vcmp.ge.f32.partialorder %v1737, 0.0
  %v1745 = vmul.f32 %v1694, 0.1
  %v1746 = vmul.f32 %v1696, 0.1
  %v1747 = vmul.f32 %v1735, 0.1
  %v1748 = vmul.f32 %v1737, 0.1
  %v1749 = vsel %vm1741, %v1694, %v1745
  %v1750 = vsel %vm1742, %v1696, %v1746
  %v1751 = vsel %vm1743, %v1735, %v1747
  %v1752 = vsel %vm1744, %v1737, %v1748
  %v1757 = vcombine.low %v1749, %v1750
  %v1758 = vcombine.low %v1751, %v1752
  %1761 = vst [vmem:[%s6] sm:$0xff] %v1757
  %1762 = vst [vmem:[%s6 + $0x8] sm:$0xff] %v1758
  // Predicated region
  $region26: #{up_simple_forward.1} parent=0 // pred_check
    _
  $region27: #{up_simple_forward.1} parent=0 // pred_check_branch
    %1764 = sbr.rel (0) target = $region29
  $region28: #{up_simple_forward.1} parent=0 // pred_region
    _
  $region29: #{up_simple_forward.1} parent=0 // pred_fallthru
    _
  // Predicated region
  $region30: #{up_simple_forward.1} parent=0 // pred_check
    _
  $region31: #{up_simple_forward.1} parent=0 // pred_check_branch
    %1766 = sbr.rel (0) target = $region33
  $region32: #{up_simple_forward.1} parent=0 // pred_region
    _
  $region33: #{up_simple_forward.1} parent=0 // pred_fallthru
    _

</llo_original>
